<compile_context>
chip_gen: v6e
topology: v6e:2x2x1
jax: 0.10.0
libtpu: 0.0.40
codegen_flags: <defaults>
</compile_context>

<pallas_src>
import functools

import jax
import jax.numpy as jnp
from jax.experimental import pallas as pl
from jax.experimental.pallas import tpu as pltpu


# ----------------------------------------------------------------------------
# Kernel: 5 fused layers of (matmul + bias [+ ReLU]) on one (C, pixels) tile.
# ----------------------------------------------------------------------------
def _featcae_kernel(
    x_ref,
    w1, b1, w2, b2, w3, b3, w4, b4, w5, b5,
    o_ref,
):
    def layer(h, w_ref, b_ref, relu):
        # MXU matmul with f32 accumulation; bias/ReLU in f32 on the VPU.
        y = jnp.dot(w_ref[...], h, preferred_element_type=jnp.float32) + b_ref[...]
        if relu:
            # Cast back to the compute dtype ONCE here so the next layer's dot
            # does not re-cast a stored f32 intermediate (halves VMEM traffic).
            y = jnp.maximum(y, 0.0).astype(w_ref.dtype)
        return y

    h = x_ref[...].astype(w1.dtype)   # in-kernel cast: no wrapper HBM pass
    h = layer(h, w1, b1, True)        # conv1 (+ folded BN) + ReLU
    h = layer(h, w2, b2, True)        # conv2 (+ folded BN) + ReLU
    h = layer(h, w3, b3, True)        # conv3 (latent) fused into conv4 (+BN) + ReLU
    h = layer(h, w4, b4, True)        # conv5 (+ folded BN) + ReLU
    h = layer(h, w5, b5, False)       # conv6 (reconstruction), stays f32
    o_ref[...] = h.astype(o_ref.dtype)


# ----------------------------------------------------------------------------
# Wrapper-side parameter preparation (exact algebra, done once under jit).
# ----------------------------------------------------------------------------
def _round_up(x, m):
    return ((x + m - 1) // m) * m


def _fold_bn(w, b, s, t):
    # (h @ w + b) * s + t  ==  h @ (w * s) + (b * s + t)
    return w * s, b * s + t


def _prepare_params(params, compute_dtype, sublane=8):
    """Fold BN + bias into each weight, fuse the linear latent layer into its
    successor, pad hidden widths to sublane multiples (zero rows/cols: exact),
    and transpose each weight to (C_out, C_in) for the channels-on-sublanes
    kernel layout. Biases become (C_out, 1) f32 columns."""
    (w1, b1, s1, t1,
     w2, b2, s2, t2,
     w3, b3,
     w4, b4, s4, t4,
     w5, b5, s5, t5,
     w6, b6) = params

    w1f, b1f = _fold_bn(w1, b1, s1, t1)
    w2f, b2f = _fold_bn(w2, b2, s2, t2)
    w4f, b4f = _fold_bn(w4, b4, s4, t4)
    w5f, b5f = _fold_bn(w5, b5, s5, t5)
    # conv3 (latent) is purely linear and feeds conv4's linear part:
    #   ((h @ w3 + b3) @ w4f + b4f) == h @ (w3 @ w4f) + (b3 @ w4f + b4f)
    w34 = jnp.dot(w3, w4f, preferred_element_type=jnp.float32)
    b34 = jnp.dot(b3, w4f, preferred_element_type=jnp.float32) + b4f

    layers = [(w1f, b1f), (w2f, b2f), (w34, b34), (w5f, b5f), (w6, b6)]

    out = []
    prev_pad = layers[0][0].shape[0]               # input channels, unpadded
    for li, (w, b) in enumerate(layers):
        cin, cout = w.shape
        if prev_pad > cin:                          # zero rows absorb padded inputs
            w = jnp.pad(w, ((0, prev_pad - cin), (0, 0)))
        last = li == len(layers) - 1
        cout_pad = cout if last else _round_up(cout, sublane)
        if cout_pad > cout:                         # zero cols (exact)
            w = jnp.pad(w, ((0, 0), (0, cout_pad - cout)))
            b = jnp.pad(b, ((0, 0), (0, cout_pad - cout)))
        wt = jnp.transpose(w).astype(compute_dtype)   # (cout_pad, cin_pad)
        bt = jnp.transpose(b).astype(jnp.float32)     # (cout_pad, 1)
        out.append((wt, bt))
        prev_pad = cout_pad
    return out


# ----------------------------------------------------------------------------
# Forward pass, NCHW in / NCHW out — no layout transposes anywhere.
# ----------------------------------------------------------------------------
def featcae_forward(x_nchw, params, *, hw_tile=None,
                    compute_dtype=jnp.bfloat16, out_dtype=jnp.float32):
    """x_nchw: (N, C_in, H, W). Returns (N, C_in, H, W) in `out_dtype`."""
    N, C, H, W = x_nchw.shape
    HW = H * W
    fused = _prepare_params(params, compute_dtype)
    flat = [p for wb in fused for p in wb]

    lane = 128
    in_itemsize = jnp.dtype(x_nchw.dtype).itemsize
    if hw_tile is None:
        base = _round_up(HW, lane)
        # Keep the f32 input block around <= 4 MiB and never above 2048 lanes
        # (v7x: 64 MiB VMEM with an f32 output double-buffer).
        cap = max(lane, min(2048, ((4 << 20) // (in_itemsize * C)) // lane * lane))
        hw_tile = min(base, cap)
        # Guarantee >= 2 grid steps whenever possible: a 1-step grid leaves one
        # of v7x's two TensorCores idle and disables DMA/compute pipelining.
        if N * ((base + hw_tile - 1) // hw_tile) < 2 and base >= 2 * lane:
            hw_tile = _round_up(base // 2, lane)
    hw_pad = _round_up(HW, hw_tile)

    x3 = x_nchw.reshape(N, C, HW)                 # contiguous: free reshape
    if hw_pad != HW:
        x3 = jnp.pad(x3, ((0, 0), (0, 0), (0, hw_pad - HW)))

    act_spec = pl.BlockSpec((None, C, hw_tile), lambda n, t: (n, 0, t))
    # Weights/biases: constant block index -> fetched once by the pipeline.
    # TODO(synk): single-buffer these (pipeline_mode=pl.Buffered(1)) once that
    # is supported on the implicit grid pipeline; saves ~0.5 MiB of VMEM.
    param_specs = [pl.BlockSpec(p.shape, lambda n, t: (0, 0)) for p in flat]

    grid = (N, hw_pad // hw_tile)

    # Honest VMEM budget from the actual per-tile working set (review: don't
    # request 48 MiB for a few-MiB footprint), clamped to [16, 32] MiB.
    cdt = jnp.dtype(compute_dtype).itemsize
    odt = jnp.dtype(out_dtype).itemsize
    widths = [int(w.shape[0]) for w, _ in fused]
    param_bytes = sum(int(p.size) * jnp.dtype(p.dtype).itemsize for p in flat)
    wset = (2 * C * hw_tile * in_itemsize            # input block (double-buffered)
            + 2 * C * hw_tile * odt                  # output block (double-buffered)
            + sum(wd * hw_tile * cdt for wd in widths)   # hidden activations
            + max(widths) * hw_tile * 4              # widest f32 pre-cast result
            + param_bytes)
    vmem_limit = min(max(int(wset * 1.25) + (2 << 20), 16 << 20), 32 << 20)

    flops = 2 * N * hw_pad * sum(int(w.shape[0]) * int(w.shape[1]) for w, _ in fused)
    bytes_accessed = (N * hw_pad * C * (in_itemsize + odt) + param_bytes)

    out = pl.pallas_call(
        _featcae_kernel,
        out_shape=jax.ShapeDtypeStruct((N, C, hw_pad), out_dtype),
        grid_spec=pltpu.PrefetchScalarGridSpec(
            num_scalar_prefetch=0,
            grid=grid,
            in_specs=[act_spec] + param_specs,
            out_specs=act_spec,
        ),
        compiler_params=pltpu.CompilerParams(
            dimension_semantics=("parallel", "parallel"),
            vmem_limit_bytes=vmem_limit,
        ),
        cost_estimate=pl.CostEstimate(
            flops=flops, transcendentals=0, bytes_accessed=bytes_accessed),
    )(x3, *flat)

    if hw_pad != HW:
        out = out[:, :, :HW]
    return out.reshape(N, C, H, W)


# ----------------------------------------------------------------------------
# Synthetic parameters (BatchNorm eval running stats folded to scale/shift).
# ----------------------------------------------------------------------------
def make_params(key, in_channels, latent_dim, eps=1e-5):
    c0 = in_channels
    c1 = (in_channels + 2 * latent_dim) // 2
    c2 = 2 * latent_dim
    c3 = latent_dim

    dims = [(c0, c1), (c1, c2), (c2, c3), (c3, c2), (c2, c1), (c1, c0)]
    bn_layers = {0, 1, 3, 4}  # layers with BatchNorm (+ ReLU)

    keys = jax.random.split(key, len(dims) * 6)
    params = []
    for li, (cin, cout) in enumerate(dims):
        kw, kb, kg, kbe, km, kv = keys[li * 6:(li + 1) * 6]
        w = jax.random.normal(kw, (cin, cout), jnp.float32) * (1.0 / jnp.sqrt(cin))
        b = jax.random.normal(kb, (1, cout), jnp.float32) * 0.01
        params += [w, b]
        if li in bn_layers:
            gamma = 1.0 + 0.1 * jax.random.normal(kg, (1, cout), jnp.float32)
            beta = 0.1 * jax.random.normal(kbe, (1, cout), jnp.float32)
            rmean = 0.1 * jax.random.normal(km, (1, cout), jnp.float32)
            rvar = jnp.abs(1.0 + 0.1 * jax.random.normal(kv, (1, cout), jnp.float32))
            scale = gamma / jnp.sqrt(rvar + eps)
            shift = beta - rmean * scale
            params += [scale, shift]
    return tuple(params)


def featcae_reference(x_nchw, params):
    """Plain-JAX f32 reference of the same folded-BN forward pass (unfused)."""
    N, C, H, W = x_nchw.shape
    h = jnp.transpose(x_nchw, (0, 2, 3, 1)).reshape(N * H * W, C).astype(jnp.float32)
    (w1, b1, s1, t1, w2, b2, s2, t2, w3, b3,
     w4, b4, s4, t4, w5, b5, s5, t5, w6, b6) = params
    h = jnp.maximum((h @ w1 + b1) * s1 + t1, 0.0)
    h = jnp.maximum((h @ w2 + b2) * s2 + t2, 0.0)
    h = h @ w3 + b3
    h = jnp.maximum((h @ w4 + b4) * s4 + t4, 0.0)
    h = jnp.maximum((h @ w5 + b5) * s5 + t5, 0.0)
    h = h @ w6 + b6
    return jnp.transpose(h.reshape(N, H, W, C), (0, 3, 1, 2))


if __name__ == "__main__":
    # Small shapes consistent with the module (1x1 convs over HxW).
    in_channels = 256
    latent_dim = 32
    N, H, W = 2, 16, 16          # 512 pixels total

    key = jax.random.PRNGKey(0)
    kx, kp = jax.random.split(key)
    x = jax.random.normal(kx, (N, in_channels, H, W), jnp.float32)
    params = make_params(kp, in_channels, latent_dim)

    ref = featcae_reference(x, params)

    # 1) f32 MXU path, forced multi-step grid (hw_tile=128 -> 4 steps): strict.
    fwd_f32 = jax.jit(functools.partial(
        featcae_forward, hw_tile=128, compute_dtype=jnp.float32))
    out_f32 = jax.block_until_ready(fwd_f32(x, params))
    assert out_f32.shape == x.shape and out_f32.dtype == jnp.float32
    assert jnp.allclose(out_f32, ref, atol=1e-3, rtol=1e-3)

    # 2) Default path: bf16 MXU operands, f32 output, auto tiling (2 steps here).
    fwd_bf16 = jax.jit(featcae_forward)
    out_bf16 = jax.block_until_ready(fwd_bf16(x, params))
    max_abs = float(jnp.max(jnp.abs(out_bf16 - ref)))
    rel_fro = float(jnp.linalg.norm(out_bf16 - ref) / jnp.linalg.norm(ref))
    assert max_abs < 5e-2 and rel_fro < 2e-2, (max_abs, rel_fro)

    # 3) bf16 output writeback (review: cuts streamed output bytes in half).
    fwd_bf16_out = jax.jit(functools.partial(
        featcae_forward, out_dtype=jnp.bfloat16))
    out_b = jax.block_until_ready(fwd_bf16_out(x, params))
    assert out_b.dtype == jnp.bfloat16
    diff = out_b.astype(jnp.float32) - ref
    max_abs = float(jnp.max(jnp.abs(diff)))
    rel_fro = float(jnp.linalg.norm(diff) / jnp.linalg.norm(ref))
    assert max_abs < 1e-1 and rel_fro < 3e-2, (max_abs, rel_fro)

    print("KERNEL_OK")
</pallas_src>

<mosaic_0001>
module attributes {stable_mosaic.version = 11 : i64} {
  func.func @_featcae_kernel(%arg0: i32, %arg1: i32, %arg2: memref<1x256x128xf32, #tpu.memory_space<vmem>>, %arg3: memref<160x256xf32, #tpu.memory_space<vmem>>, %arg4: memref<160x1xf32, #tpu.memory_space<vmem>>, %arg5: memref<64x160xf32, #tpu.memory_space<vmem>>, %arg6: memref<64x1xf32, #tpu.memory_space<vmem>>, %arg7: memref<64x64xf32, #tpu.memory_space<vmem>>, %arg8: memref<64x1xf32, #tpu.memory_space<vmem>>, %arg9: memref<160x64xf32, #tpu.memory_space<vmem>>, %arg10: memref<160x1xf32, #tpu.memory_space<vmem>>, %arg11: memref<256x160xf32, #tpu.memory_space<vmem>>, %arg12: memref<256x1xf32, #tpu.memory_space<vmem>>, %arg13: memref<1x256x128xf32, #tpu.memory_space<vmem>>) attributes {dimension_semantics = [#tpu.dimension_semantics<parallel>, #tpu.dimension_semantics<parallel>], iteration_bounds = array<i64: 2, 2>, scalar_prefetch = 0 : i64, scratch_operands = 0 : i64, tpu.core_type = #tpu.core_type<tc>, window_params = [{transform_indices = @transform_0, window_bounds = array<i64: 1, 256, 128>}, {pipeline_mode = #tpu.pipeline_mode<synchronous>, transform_indices = @transform_1, window_bounds = array<i64: 160, 256>}, {pipeline_mode = #tpu.pipeline_mode<synchronous>, transform_indices = @transform_2, window_bounds = array<i64: 160, 1>}, {pipeline_mode = #tpu.pipeline_mode<synchronous>, transform_indices = @transform_3, window_bounds = array<i64: 64, 160>}, {pipeline_mode = #tpu.pipeline_mode<synchronous>, transform_indices = @transform_4, window_bounds = array<i64: 64, 1>}, {pipeline_mode = #tpu.pipeline_mode<synchronous>, transform_indices = @transform_5, window_bounds = array<i64: 64, 64>}, {pipeline_mode = #tpu.pipeline_mode<synchronous>, transform_indices = @transform_6, window_bounds = array<i64: 64, 1>}, {pipeline_mode = #tpu.pipeline_mode<synchronous>, transform_indices = @transform_7, window_bounds = array<i64: 160, 64>}, {pipeline_mode = #tpu.pipeline_mode<synchronous>, transform_indices = @transform_8, window_bounds = array<i64: 160, 1>}, {pipeline_mode = #tpu.pipeline_mode<synchronous>, transform_indices = @transform_9, window_bounds = array<i64: 256, 160>}, {pipeline_mode = #tpu.pipeline_mode<synchronous>, transform_indices = @transform_10, window_bounds = array<i64: 256, 1>}, {transform_indices = @transform_11, window_bounds = array<i64: 1, 256, 128>}]} {
    %c0 = arith.constant 0 : index
    %c0_0 = arith.constant 0 : index
    %c0_1 = arith.constant 0 : index
    %0 = vector.load %arg2[%c0, %c0_0, %c0_1] : memref<1x256x128xf32, #tpu.memory_space<vmem>>, vector<1x256x128xf32>
    %1 = vector.shape_cast %0 : vector<1x256x128xf32> to vector<256x128xf32>
    %c0_2 = arith.constant 0 : index
    %c0_3 = arith.constant 0 : index
    %2 = vector.load %arg3[%c0_2, %c0_3] : memref<160x256xf32, #tpu.memory_space<vmem>>, vector<160x256xf32>
    %cst = arith.constant dense<0.000000e+00> : vector<160x128xf32>
    %3 = tpu.matmul %2, %1, %cst {dimension_numbers = #tpu.dot_dimension_numbers<[1], [0], [0], [1], [0, 0, 1, 1], [], []>} : vector<160x256xf32>, vector<256x128xf32>, vector<160x128xf32> -> vector<160x128xf32>
    %c0_4 = arith.constant 0 : index
    %c0_5 = arith.constant 0 : index
    %4 = vector.load %arg4[%c0_4, %c0_5] : memref<160x1xf32, #tpu.memory_space<vmem>>, vector<160x1xf32>
    %5 = vector.broadcast %4 : vector<160x1xf32> to vector<160x128xf32>
    %6 = arith.addf %3, %5 : vector<160x128xf32>
    %cst_6 = arith.constant 0.000000e+00 : f32
    %7 = vector.broadcast %cst_6 : f32 to vector<160x128xf32>
    %8 = arith.maximumf %6, %7 : vector<160x128xf32>
    %c0_7 = arith.constant 0 : index
    %c0_8 = arith.constant 0 : index
    %9 = vector.load %arg5[%c0_7, %c0_8] : memref<64x160xf32, #tpu.memory_space<vmem>>, vector<64x160xf32>
    %cst_9 = arith.constant dense<0.000000e+00> : vector<64x128xf32>
    %10 = tpu.matmul %9, %8, %cst_9 {dimension_numbers = #tpu.dot_dimension_numbers<[1], [0], [0], [1], [0, 0, 1, 1], [], []>} : vector<64x160xf32>, vector<160x128xf32>, vector<64x128xf32> -> vector<64x128xf32>
    %c0_10 = arith.constant 0 : index
    %c0_11 = arith.constant 0 : index
    %11 = vector.load %arg6[%c0_10, %c0_11] : memref<64x1xf32, #tpu.memory_space<vmem>>, vector<64x1xf32>
    %12 = vector.broadcast %11 : vector<64x1xf32> to vector<64x128xf32>
    %13 = arith.addf %10, %12 : vector<64x128xf32>
    %cst_12 = arith.constant 0.000000e+00 : f32
    %14 = vector.broadcast %cst_12 : f32 to vector<64x128xf32>
    %15 = arith.maximumf %13, %14 : vector<64x128xf32>
    %c0_13 = arith.constant 0 : index
    %c0_14 = arith.constant 0 : index
    %16 = vector.load %arg7[%c0_13, %c0_14] : memref<64x64xf32, #tpu.memory_space<vmem>>, vector<64x64xf32>
    %cst_15 = arith.constant dense<0.000000e+00> : vector<64x128xf32>
    %17 = tpu.matmul %16, %15, %cst_15 {dimension_numbers = #tpu.dot_dimension_numbers<[1], [0], [0], [1], [0, 0, 1, 1], [], []>} : vector<64x64xf32>, vector<64x128xf32>, vector<64x128xf32> -> vector<64x128xf32>
    %c0_16 = arith.constant 0 : index
    %c0_17 = arith.constant 0 : index
    %18 = vector.load %arg8[%c0_16, %c0_17] : memref<64x1xf32, #tpu.memory_space<vmem>>, vector<64x1xf32>
    %19 = vector.broadcast %18 : vector<64x1xf32> to vector<64x128xf32>
    %20 = arith.addf %17, %19 : vector<64x128xf32>
    %cst_18 = arith.constant 0.000000e+00 : f32
    %21 = vector.broadcast %cst_18 : f32 to vector<64x128xf32>
    %22 = arith.maximumf %20, %21 : vector<64x128xf32>
    %c0_19 = arith.constant 0 : index
    %c0_20 = arith.constant 0 : index
    %23 = vector.load %arg9[%c0_19, %c0_20] : memref<160x64xf32, #tpu.memory_space<vmem>>, vector<160x64xf32>
    %cst_21 = arith.constant dense<0.000000e+00> : vector<160x128xf32>
    %24 = tpu.matmul %23, %22, %cst_21 {dimension_numbers = #tpu.dot_dimension_numbers<[1], [0], [0], [1], [0, 0, 1, 1], [], []>} : vector<160x64xf32>, vector<64x128xf32>, vector<160x128xf32> -> vector<160x128xf32>
    %c0_22 = arith.constant 0 : index
    %c0_23 = arith.constant 0 : index
    %25 = vector.load %arg10[%c0_22, %c0_23] : memref<160x1xf32, #tpu.memory_space<vmem>>, vector<160x1xf32>
    %26 = vector.broadcast %25 : vector<160x1xf32> to vector<160x128xf32>
    %27 = arith.addf %24, %26 : vector<160x128xf32>
    %cst_24 = arith.constant 0.000000e+00 : f32
    %28 = vector.broadcast %cst_24 : f32 to vector<160x128xf32>
    %29 = arith.maximumf %27, %28 : vector<160x128xf32>
    %c0_25 = arith.constant 0 : index
    %c0_26 = arith.constant 0 : index
    %30 = vector.load %arg11[%c0_25, %c0_26] : memref<256x160xf32, #tpu.memory_space<vmem>>, vector<256x160xf32>
    %cst_27 = arith.constant dense<0.000000e+00> : vector<256x128xf32>
    %31 = tpu.matmul %30, %29, %cst_27 {dimension_numbers = #tpu.dot_dimension_numbers<[1], [0], [0], [1], [0, 0, 1, 1], [], []>} : vector<256x160xf32>, vector<160x128xf32>, vector<256x128xf32> -> vector<256x128xf32>
    %c0_28 = arith.constant 0 : index
    %c0_29 = arith.constant 0 : index
    %32 = vector.load %arg12[%c0_28, %c0_29] : memref<256x1xf32, #tpu.memory_space<vmem>>, vector<256x1xf32>
    %33 = vector.broadcast %32 : vector<256x1xf32> to vector<256x128xf32>
    %34 = arith.addf %31, %33 : vector<256x128xf32>
    %c0_30 = arith.constant 0 : index
    %c0_31 = arith.constant 0 : index
    %c0_32 = arith.constant 0 : index
    %35 = vector.load %arg13[%c0_30, %c0_31, %c0_32] : memref<1x256x128xf32, #tpu.memory_space<vmem>>, vector<1x256x128xf32>
    %36 = vector.shape_cast %35 : vector<1x256x128xf32> to vector<256x128xf32>
    %37 = vector.shape_cast %34 : vector<256x128xf32> to vector<1x256x128xf32>
    tpu.vector_store %arg13[%c0_30, %c0_31, %c0_32], %37 {strides = array<i32>} : memref<1x256x128xf32, #tpu.memory_space<vmem>>, vector<1x256x128xf32>,
    return
  }
  func.func @transform_0(%arg0: i32, %arg1: i32) -> (i32, i32, i32) {
    %c0_i32 = arith.constant 0 : i32
    %c0_i32_0 = arith.constant 0 : i32
    return %arg0, %c0_i32, %arg1 : i32, i32, i32
  }
  func.func @transform_1(%arg0: i32, %arg1: i32) -> (i32, i32) {
    %c0_i32 = arith.constant 0 : i32
    %c0_i32_0 = arith.constant 0 : i32
    %c0_i32_1 = arith.constant 0 : i32
    return %c0_i32, %c0_i32_0 : i32, i32
  }
  func.func @transform_2(%arg0: i32, %arg1: i32) -> (i32, i32) {
    %c0_i32 = arith.constant 0 : i32
    %c0_i32_0 = arith.constant 0 : i32
    %c0_i32_1 = arith.constant 0 : i32
    return %c0_i32, %c0_i32_0 : i32, i32
  }
  func.func @transform_3(%arg0: i32, %arg1: i32) -> (i32, i32) {
    %c0_i32 = arith.constant 0 : i32
    %c0_i32_0 = arith.constant 0 : i32
    %c0_i32_1 = arith.constant 0 : i32
    return %c0_i32, %c0_i32_0 : i32, i32
  }
  func.func @transform_4(%arg0: i32, %arg1: i32) -> (i32, i32) {
    %c0_i32 = arith.constant 0 : i32
    %c0_i32_0 = arith.constant 0 : i32
    %c0_i32_1 = arith.constant 0 : i32
    return %c0_i32, %c0_i32_0 : i32, i32
  }
  func.func @transform_5(%arg0: i32, %arg1: i32) -> (i32, i32) {
    %c0_i32 = arith.constant 0 : i32
    %c0_i32_0 = arith.constant 0 : i32
    %c0_i32_1 = arith.constant 0 : i32
    return %c0_i32, %c0_i32_0 : i32, i32
  }
  func.func @transform_6(%arg0: i32, %arg1: i32) -> (i32, i32) {
    %c0_i32 = arith.constant 0 : i32
    %c0_i32_0 = arith.constant 0 : i32
    %c0_i32_1 = arith.constant 0 : i32
    return %c0_i32, %c0_i32_0 : i32, i32
  }
  func.func @transform_7(%arg0: i32, %arg1: i32) -> (i32, i32) {
    %c0_i32 = arith.constant 0 : i32
    %c0_i32_0 = arith.constant 0 : i32
    %c0_i32_1 = arith.constant 0 : i32
    return %c0_i32, %c0_i32_0 : i32, i32
  }
  func.func @transform_8(%arg0: i32, %arg1: i32) -> (i32, i32) {
    %c0_i32 = arith.constant 0 : i32
    %c0_i32_0 = arith.constant 0 : i32
    %c0_i32_1 = arith.constant 0 : i32
    return %c0_i32, %c0_i32_0 : i32, i32
  }
  func.func @transform_9(%arg0: i32, %arg1: i32) -> (i32, i32) {
    %c0_i32 = arith.constant 0 : i32
    %c0_i32_0 = arith.constant 0 : i32
    %c0_i32_1 = arith.constant 0 : i32
    return %c0_i32, %c0_i32_0 : i32, i32
  }
  func.func @transform_10(%arg0: i32, %arg1: i32) -> (i32, i32) {
    %c0_i32 = arith.constant 0 : i32
    %c0_i32_0 = arith.constant 0 : i32
    %c0_i32_1 = arith.constant 0 : i32
    return %c0_i32, %c0_i32_0 : i32, i32
  }
  func.func @transform_11(%arg0: i32, %arg1: i32) -> (i32, i32, i32) {
    %c0_i32 = arith.constant 0 : i32
    %c0_i32_0 = arith.constant 0 : i32
    return %arg0, %c0_i32, %arg1 : i32, i32, i32
  }
}

</mosaic_0001>

<llo_original>
// kernel: featcae_forward.1
$region0: #{featcae_forward.1}
  #allocation0 [shape = 'u32[]', space=smem, size = 0x4, offset = 0x4, fixed_abs, tag = 'smem constant byte address 0x4 - core index']
  #allocation1 [shape = 'u32[144,128]{1,0:T(1,128)}', space=vmem, size = 0x12000, scoped, tag = 'internal scratch']
  %s0 = inlined_call_operand.vmem [shape: f32[2,256,256], index: 0, kind: input, shape index: {}]
  %s1 = inlined_call_operand.vmem [shape: f32[160,256], index: 1, kind: input, shape index: {}]
  %s2 = inlined_call_operand.vmem [shape: f32[160,1], index: 2, kind: input, shape index: {}]
  %s3 = inlined_call_operand.vmem [shape: f32[64,160], index: 3, kind: input, shape index: {}]
  %s4 = inlined_call_operand.vmem [shape: f32[64,1], index: 4, kind: input, shape index: {}]
  %s5 = inlined_call_operand.vmem [shape: f32[64,64], index: 5, kind: input, shape index: {}]
  %s6 = inlined_call_operand.vmem [shape: f32[64,1], index: 6, kind: input, shape index: {}]
  %s7 = inlined_call_operand.vmem [shape: f32[160,64], index: 7, kind: input, shape index: {}]
  %s8 = inlined_call_operand.vmem [shape: f32[160,1], index: 8, kind: input, shape index: {}]
  %s9 = inlined_call_operand.vmem [shape: f32[256,160], index: 9, kind: input, shape index: {}]
  %s10 = inlined_call_operand.vmem [shape: f32[256,1], index: 10, kind: input, shape index: {}]
  %s11 = inlined_call_operand.vmem [shape: f32[2,256,256], index: 11, kind: output, shape index: {}]
  %s12 = sld [smem:[#allocation0]]
  $region149: #{featcae_forward.1} parent=0
    _
  %s14 = ssub.s32 1, %s12
  %s15 = scalar_select 0, %s14, %s12
  $region1: #{featcae_forward.1} parent=0
    #allocation2 [shape = 'u8[262144]{0}', space=vmem, size = 0x40000, scoped, tag = 'input window, operand 0']
    #allocation3 [shape = 'u8[262144]{0}', space=vmem, size = 0x40000, scoped, tag = 'output window, operand 0']
    loop: start=0, step=1, limit=6
    $region2: #{featcae_forward.1} parent=1 // loop_pre_header
      _
    $region3: #{featcae_forward.1} parent=1 // loop_header
      %s17 = sphi 0, %s21
      %p18 = scmp.ge.s32.totalorder %s17, 6
      %s24 = sphi 0, %s36
      %s25 = sphi 0, %s32
      %s26 = sphi 0, %s24
      %s27 = sphi 0, %s25
      %s28 = sphi 0, %s26
      %s29 = sphi 0, %s27
      %s41 = sphi 0, %s43
      %s44 = sphi 0, %s41
      %s45 = sphi 0, %s44
      %s61 = sphi 0, %s45
      %s65 = sphi 0, %s65
      %s67 = sphi 0, %s65
      %s68 = sphi 0, %s67
      %s82 = sphi 0, %s68
      %s86 = sphi 0, %s86
      %s88 = sphi 0, %s86
      %s89 = sphi 0, %s88
      %s103 = sphi 0, %s89
      %s107 = sphi 0, %s107
      %s109 = sphi 0, %s107
      %s110 = sphi 0, %s109
      %s124 = sphi 0, %s110
      %s128 = sphi 0, %s128
      %s130 = sphi 0, %s128
      %s131 = sphi 0, %s130
      %s145 = sphi 0, %s131
      %s149 = sphi 0, %s149
      %s151 = sphi 0, %s149
      %s152 = sphi 0, %s151
      %s166 = sphi 0, %s152
      %s170 = sphi 0, %s170
      %s172 = sphi 0, %s170
      %s173 = sphi 0, %s172
      %s187 = sphi 0, %s173
      %s191 = sphi 0, %s191
      %s193 = sphi 0, %s191
      %s194 = sphi 0, %s193
      %s208 = sphi 0, %s194
      %s212 = sphi 0, %s212
      %s214 = sphi 0, %s212
      %s215 = sphi 0, %s214
      %s229 = sphi 0, %s215
      %s233 = sphi 0, %s233
      %s235 = sphi 0, %s233
      %s236 = sphi 0, %s235
      %s250 = sphi 0, %s236
      %s254 = sphi 0, %s254
      %s256 = sphi 0, %s254
      %s257 = sphi 0, %s256
      %s271 = sphi 0, %s257
      %s279 = sphi 0, %s281
      %s282 = sphi 0, %s279
      %s283 = sphi 0, %s282
      %s299 = sphi 0, %s283
    $region4: #{featcae_forward.1} parent=1 // loop_header_branch
      %20 = sbr.rel (%p18) target = $region8
    $region5: #{featcae_forward.1} parent=1 // loop_body
      %s22 = ssub.s32 %s17, 1
      %s23 = ssub.s32 %s17, 2
      %s30 = sadd.s32 1, %s25
      %p31 = scmp.ge.s32.totalorder %s30, 2
      %s32 = scalar_select %p31, 0, %s30
      %s33 = sadd.s32 1, %s24
      %s34 = scalar_select %p31, %s33, %s24
      %p35 = scmp.ge.s32.totalorder %s34, 2
      %s36 = scalar_select %p35, 0, %s34
      %s37 = ssub.s32 %s24, %s36
      %s38 = ssub.s32 %s25, %s32
      %s39 = sor.u32 %s37, %s38
      %p40 = scmp.eq.s32.totalorder %s39, 0
      %s42 = sadd.s32 %s41, 1
      %s43 = scalar_select %p40, %s41, %s42
      %p46 = pneg %p40
      %p47 = scmp.eq.s32.totalorder %s17, 3
      %p48 = por %p46, %p47
      %p49 = scmp.ne.s32.totalorder %s41, %s44
      %p50 = scmp.eq.s32.totalorder %s17, 0
      %p51 = por %p49, %p50
      %p52 = scmp.ne.s32.totalorder %s41, %s44
      %p53 = scmp.eq.s32.totalorder %s22, 3
      %p54 = por %p52, %p53
      %p55 = scmp.ne.s32.totalorder %s44, %s45
      %p56 = scmp.eq.s32.totalorder %s22, 0
      %p57 = por %p55, %p56
      %p58 = scmp.ne.s32.totalorder %s44, %s45
      %p59 = scmp.eq.s32.totalorder %s23, 3
      %p60 = por %p58, %p59
      %p62 = scmp.ne.s32.totalorder %s45, %s61
      %p63 = scmp.eq.s32.totalorder %s23, 0
      %p64 = por %p62, %p63
      %s66 = sadd.s32 %s65, 1
      %p69 = scmp.eq.s32.totalorder %s17, 3
      %p70 = scmp.ne.s32.totalorder %s65, %s67
      %p71 = scmp.eq.s32.totalorder %s17, 0
      %p72 = por %p70, %p71
      %p73 = scmp.ne.s32.totalorder %s65, %s67
      %p74 = scmp.eq.s32.totalorder %s22, 3
      %p75 = por %p73, %p74
      %p76 = scmp.ne.s32.totalorder %s67, %s68
      %p77 = scmp.eq.s32.totalorder %s22, 0
      %p78 = por %p76, %p77
      %p79 = scmp.ne.s32.totalorder %s67, %s68
      %p80 = scmp.eq.s32.totalorder %s23, 3
      %p81 = por %p79, %p80
      %p83 = scmp.ne.s32.totalorder %s68, %s82
      %p84 = scmp.eq.s32.totalorder %s23, 0
      %p85 = por %p83, %p84
      %s87 = sadd.s32 %s86, 1
      %p90 = scmp.eq.s32.totalorder %s17, 3
      %p91 = scmp.ne.s32.totalorder %s86, %s88
      %p92 = scmp.eq.s32.totalorder %s17, 0
      %p93 = por %p91, %p92
      %p94 = scmp.ne.s32.totalorder %s86, %s88
      %p95 = scmp.eq.s32.totalorder %s22, 3
      %p96 = por %p94, %p95
      %p97 = scmp.ne.s32.totalorder %s88, %s89
      %p98 = scmp.eq.s32.totalorder %s22, 0
      %p99 = por %p97, %p98
      %p100 = scmp.ne.s32.totalorder %s88, %s89
      %p101 = scmp.eq.s32.totalorder %s23, 3
      %p102 = por %p100, %p101
      %p104 = scmp.ne.s32.totalorder %s89, %s103
      %p105 = scmp.eq.s32.totalorder %s23, 0
      %p106 = por %p104, %p105
      %s108 = sadd.s32 %s107, 1
      %p111 = scmp.eq.s32.totalorder %s17, 3
      %p112 = scmp.ne.s32.totalorder %s107, %s109
      %p113 = scmp.eq.s32.totalorder %s17, 0
      %p114 = por %p112, %p113
      %p115 = scmp.ne.s32.totalorder %s107, %s109
      %p116 = scmp.eq.s32.totalorder %s22, 3
      %p117 = por %p115, %p116
      %p118 = scmp.ne.s32.totalorder %s109, %s110
      %p119 = scmp.eq.s32.totalorder %s22, 0
      %p120 = por %p118, %p119
      %p121 = scmp.ne.s32.totalorder %s109, %s110
      %p122 = scmp.eq.s32.totalorder %s23, 3
      %p123 = por %p121, %p122
      %p125 = scmp.ne.s32.totalorder %s110, %s124
      %p126 = scmp.eq.s32.totalorder %s23, 0
      %p127 = por %p125, %p126
      %s129 = sadd.s32 %s128, 1
      %p132 = scmp.eq.s32.totalorder %s17, 3
      %p133 = scmp.ne.s32.totalorder %s128, %s130
      %p134 = scmp.eq.s32.totalorder %s17, 0
      %p135 = por %p133, %p134
      %p136 = scmp.ne.s32.totalorder %s128, %s130
      %p137 = scmp.eq.s32.totalorder %s22, 3
      %p138 = por %p136, %p137
      %p139 = scmp.ne.s32.totalorder %s130, %s131
      %p140 = scmp.eq.s32.totalorder %s22, 0
      %p141 = por %p139, %p140
      %p142 = scmp.ne.s32.totalorder %s130, %s131
      %p143 = scmp.eq.s32.totalorder %s23, 3
      %p144 = por %p142, %p143
      %p146 = scmp.ne.s32.totalorder %s131, %s145
      %p147 = scmp.eq.s32.totalorder %s23, 0
      %p148 = por %p146, %p147
      %s150 = sadd.s32 %s149, 1
      %p153 = scmp.eq.s32.totalorder %s17, 3
      %p154 = scmp.ne.s32.totalorder %s149, %s151
      %p155 = scmp.eq.s32.totalorder %s17, 0
      %p156 = por %p154, %p155
      %p157 = scmp.ne.s32.totalorder %s149, %s151
      %p158 = scmp.eq.s32.totalorder %s22, 3
      %p159 = por %p157, %p158
      %p160 = scmp.ne.s32.totalorder %s151, %s152
      %p161 = scmp.eq.s32.totalorder %s22, 0
      %p162 = por %p160, %p161
      %p163 = scmp.ne.s32.totalorder %s151, %s152
      %p164 = scmp.eq.s32.totalorder %s23, 3
      %p165 = por %p163, %p164
      %p167 = scmp.ne.s32.totalorder %s152, %s166
      %p168 = scmp.eq.s32.totalorder %s23, 0
      %p169 = por %p167, %p168
      %s171 = sadd.s32 %s170, 1
      %p174 = scmp.eq.s32.totalorder %s17, 3
      %p175 = scmp.ne.s32.totalorder %s170, %s172
      %p176 = scmp.eq.s32.totalorder %s17, 0
      %p177 = por %p175, %p176
      %p178 = scmp.ne.s32.totalorder %s170, %s172
      %p179 = scmp.eq.s32.totalorder %s22, 3
      %p180 = por %p178, %p179
      %p181 = scmp.ne.s32.totalorder %s172, %s173
      %p182 = scmp.eq.s32.totalorder %s22, 0
      %p183 = por %p181, %p182
      %p184 = scmp.ne.s32.totalorder %s172, %s173
      %p185 = scmp.eq.s32.totalorder %s23, 3
      %p186 = por %p184, %p185
      %p188 = scmp.ne.s32.totalorder %s173, %s187
      %p189 = scmp.eq.s32.totalorder %s23, 0
      %p190 = por %p188, %p189
      %s192 = sadd.s32 %s191, 1
      %p195 = scmp.eq.s32.totalorder %s17, 3
      %p196 = scmp.ne.s32.totalorder %s191, %s193
      %p197 = scmp.eq.s32.totalorder %s17, 0
      %p198 = por %p196, %p197
      %p199 = scmp.ne.s32.totalorder %s191, %s193
      %p200 = scmp.eq.s32.totalorder %s22, 3
      %p201 = por %p199, %p200
      %p202 = scmp.ne.s32.totalorder %s193, %s194
      %p203 = scmp.eq.s32.totalorder %s22, 0
      %p204 = por %p202, %p203
      %p205 = scmp.ne.s32.totalorder %s193, %s194
      %p206 = scmp.eq.s32.totalorder %s23, 3
      %p207 = por %p205, %p206
      %p209 = scmp.ne.s32.totalorder %s194, %s208
      %p210 = scmp.eq.s32.totalorder %s23, 0
      %p211 = por %p209, %p210
      %s213 = sadd.s32 %s212, 1
      %p216 = scmp.eq.s32.totalorder %s17, 3
      %p217 = scmp.ne.s32.totalorder %s212, %s214
      %p218 = scmp.eq.s32.totalorder %s17, 0
      %p219 = por %p217, %p218
      %p220 = scmp.ne.s32.totalorder %s212, %s214
      %p221 = scmp.eq.s32.totalorder %s22, 3
      %p222 = por %p220, %p221
      %p223 = scmp.ne.s32.totalorder %s214, %s215
      %p224 = scmp.eq.s32.totalorder %s22, 0
      %p225 = por %p223, %p224
      %p226 = scmp.ne.s32.totalorder %s214, %s215
      %p227 = scmp.eq.s32.totalorder %s23, 3
      %p228 = por %p226, %p227
      %p230 = scmp.ne.s32.totalorder %s215, %s229
      %p231 = scmp.eq.s32.totalorder %s23, 0
      %p232 = por %p230, %p231
      %s234 = sadd.s32 %s233, 1
      %p237 = scmp.eq.s32.totalorder %s17, 3
      %p238 = scmp.ne.s32.totalorder %s233, %s235
      %p239 = scmp.eq.s32.totalorder %s17, 0
      %p240 = por %p238, %p239
      %p241 = scmp.ne.s32.totalorder %s233, %s235
      %p242 = scmp.eq.s32.totalorder %s22, 3
      %p243 = por %p241, %p242
      %p244 = scmp.ne.s32.totalorder %s235, %s236
      %p245 = scmp.eq.s32.totalorder %s22, 0
      %p246 = por %p244, %p245
      %p247 = scmp.ne.s32.totalorder %s235, %s236
      %p248 = scmp.eq.s32.totalorder %s23, 3
      %p249 = por %p247, %p248
      %p251 = scmp.ne.s32.totalorder %s236, %s250
      %p252 = scmp.eq.s32.totalorder %s23, 0
      %p253 = por %p251, %p252
      %s255 = sadd.s32 %s254, 1
      %p258 = scmp.eq.s32.totalorder %s17, 3
      %p259 = scmp.ne.s32.totalorder %s254, %s256
      %p260 = scmp.eq.s32.totalorder %s17, 0
      %p261 = por %p259, %p260
      %p262 = scmp.ne.s32.totalorder %s254, %s256
      %p263 = scmp.eq.s32.totalorder %s22, 3
      %p264 = por %p262, %p263
      %p265 = scmp.ne.s32.totalorder %s256, %s257
      %p266 = scmp.eq.s32.totalorder %s22, 0
      %p267 = por %p265, %p266
      %p268 = scmp.ne.s32.totalorder %s256, %s257
      %p269 = scmp.eq.s32.totalorder %s23, 3
      %p270 = por %p268, %p269
      %p272 = scmp.ne.s32.totalorder %s257, %s271
      %p273 = scmp.eq.s32.totalorder %s23, 0
      %p274 = por %p272, %p273
      %s275 = ssub.s32 %s24, %s36
      %s276 = ssub.s32 %s25, %s32
      %s277 = sor.u32 %s275, %s276
      %p278 = scmp.eq.s32.totalorder %s277, 0
      %s280 = sadd.s32 %s279, 1
      %s281 = scalar_select %p278, %s279, %s280
      %p284 = pneg %p278
      %p285 = scmp.eq.s32.totalorder %s17, 3
      %p286 = por %p284, %p285
      %p287 = scmp.ne.s32.totalorder %s279, %s282
      %p288 = scmp.eq.s32.totalorder %s17, 0
      %p289 = por %p287, %p288
      %p290 = scmp.ne.s32.totalorder %s279, %s282
      %p291 = scmp.eq.s32.totalorder %s22, 3
      %p292 = por %p290, %p291
      %p293 = scmp.ne.s32.totalorder %s282, %s283
      %p294 = scmp.eq.s32.totalorder %s22, 0
      %p295 = por %p293, %p294
      %p296 = scmp.ne.s32.totalorder %s282, %s283
      %p297 = scmp.eq.s32.totalorder %s23, 3
      %p298 = por %p296, %p297
      %p300 = scmp.ne.s32.totalorder %s283, %s299
      %p301 = scmp.eq.s32.totalorder %s23, 0
      %p302 = por %p300, %p301
      %p303 = scmp.le.s32.totalorder 1, %s17
      %p304 = scmp.lt.s32.totalorder %s17, 5
      %p305 = pnand %p303, %p304
      %p306 = pneg %p305
      // Predicated region
      $region9: #{featcae_forward.1} parent=5 // pred_check
        _
      $region10: #{featcae_forward.1} parent=5 // pred_check_branch
        %308 = sbr.rel (%p305) target = $region12
      $region11: #{featcae_forward.1} parent=5 // pred_region
        %s309 = ssub.s32 %s17, 1
        // Predicated region
        $region13: #{featcae_forward.1} parent=11 // pred_check
          %p310 = pneg %p78
        $region14: #{featcae_forward.1} parent=11 // pred_check_branch
          %312 = sbr.rel (%p310) target = $region16
        $region15: #{featcae_forward.1} parent=11 // pred_region
          _
        $region16: #{featcae_forward.1} parent=11 // pred_fallthru
          _
        // Predicated region
        $region17: #{featcae_forward.1} parent=11 // pred_check
          %p313 = pneg %p99
        $region18: #{featcae_forward.1} parent=11 // pred_check_branch
          %315 = sbr.rel (%p313) target = $region20
        $region19: #{featcae_forward.1} parent=11 // pred_region
          _
        $region20: #{featcae_forward.1} parent=11 // pred_fallthru
          _
        // Predicated region
        $region21: #{featcae_forward.1} parent=11 // pred_check
          %p316 = pneg %p120
        $region22: #{featcae_forward.1} parent=11 // pred_check_branch
          %318 = sbr.rel (%p316) target = $region24
        $region23: #{featcae_forward.1} parent=11 // pred_region
          _
        $region24: #{featcae_forward.1} parent=11 // pred_fallthru
          _
        // Predicated region
        $region25: #{featcae_forward.1} parent=11 // pred_check
          %p319 = pneg %p141
        $region26: #{featcae_forward.1} parent=11 // pred_check_branch
          %321 = sbr.rel (%p319) target = $region28
        $region27: #{featcae_forward.1} parent=11 // pred_region
          _
        $region28: #{featcae_forward.1} parent=11 // pred_fallthru
          _
        // Predicated region
        $region29: #{featcae_forward.1} parent=11 // pred_check
          %p322 = pneg %p162
        $region30: #{featcae_forward.1} parent=11 // pred_check_branch
          %324 = sbr.rel (%p322) target = $region32
        $region31: #{featcae_forward.1} parent=11 // pred_region
          _
        $region32: #{featcae_forward.1} parent=11 // pred_fallthru
          _
        // Predicated region
        $region33: #{featcae_forward.1} parent=11 // pred_check
          %p325 = pneg %p183
        $region34: #{featcae_forward.1} parent=11 // pred_check_branch
          %327 = sbr.rel (%p325) target = $region36
        $region35: #{featcae_forward.1} parent=11 // pred_region
          _
        $region36: #{featcae_forward.1} parent=11 // pred_fallthru
          _
        // Predicated region
        $region37: #{featcae_forward.1} parent=11 // pred_check
          %p328 = pneg %p204
        $region38: #{featcae_forward.1} parent=11 // pred_check_branch
          %330 = sbr.rel (%p328) target = $region40
        $region39: #{featcae_forward.1} parent=11 // pred_region
          _
        $region40: #{featcae_forward.1} parent=11 // pred_fallthru
          _
        // Predicated region
        $region41: #{featcae_forward.1} parent=11 // pred_check
          %p331 = pneg %p225
        $region42: #{featcae_forward.1} parent=11 // pred_check_branch
          %333 = sbr.rel (%p331) target = $region44
        $region43: #{featcae_forward.1} parent=11 // pred_region
          _
        $region44: #{featcae_forward.1} parent=11 // pred_fallthru
          _
        // Predicated region
        $region45: #{featcae_forward.1} parent=11 // pred_check
          %p334 = pneg %p246
        $region46: #{featcae_forward.1} parent=11 // pred_check_branch
          %336 = sbr.rel (%p334) target = $region48
        $region47: #{featcae_forward.1} parent=11 // pred_region
          _
        $region48: #{featcae_forward.1} parent=11 // pred_fallthru
          _
        // Predicated region
        $region49: #{featcae_forward.1} parent=11 // pred_check
          %p337 = pneg %p267
        $region50: #{featcae_forward.1} parent=11 // pred_check_branch
          %339 = sbr.rel (%p337) target = $region52
        $region51: #{featcae_forward.1} parent=11 // pred_region
          _
        $region52: #{featcae_forward.1} parent=11 // pred_fallthru
          _
      $region12: #{featcae_forward.1} parent=5 // pred_fallthru
        _
      %p340 = scmp.lt.s32.totalorder %s17, 4
      // Predicated region
      $region53: #{featcae_forward.1} parent=5 // pred_check
        %p341 = pneg %p340
      $region54: #{featcae_forward.1} parent=5 // pred_check_branch
        %343 = sbr.rel (%p341) target = $region56
      $region55: #{featcae_forward.1} parent=5 // pred_region
        // Predicated region
        $region57: #{featcae_forward.1} parent=55 // pred_check
          %p344 = pneg %p51
        $region58: #{featcae_forward.1} parent=55 // pred_check_branch
          %346 = sbr.rel (%p344) target = $region60
        $region59: #{featcae_forward.1} parent=55 // pred_region
          %s347 = sand.u32 %s41, 1
          %s348 = sand.u32 %s41, 1
          %s349 = smul.addr %s348, 256
          %s350 = scalar_lea.vmem [#allocation2], %s349
          %s351 = smul.addr %s24, 64
          %s352 = sadd.s32 %s25, %s351
          %s353 = smul.addr %s352, 8
          %s354 = scalar_lea.vmem %s0, %s353
          // Predicated region
          $region61: #{featcae_forward.1} parent=59 // pred_check
            _
          $region62: #{featcae_forward.1} parent=59 // pred_check_branch
            %356 = sbr.rel (0) target = $region64
          $region63: #{featcae_forward.1} parent=59 // pred_region
            // Predicated region
            $region65: #{featcae_forward.1} parent=63 // pred_check
              _
            $region66: #{featcae_forward.1} parent=63 // pred_check_branch
              %358 = sbr.rel (0) target = $region68
            $region67: #{featcae_forward.1} parent=63 // pred_region
              // Predicated region
              $region80: #{featcae_forward.1} parent=67 // pred_check
                _
              $region81: #{featcae_forward.1} parent=67 // pred_check_branch
                %436 = sbr.rel (0) target = $region83
              $region82: #{featcae_forward.1} parent=67 // pred_region
                loop: start=0, step=1, limit=1
                $region84: #{featcae_forward.1} parent=82 // loop_pre_header
                  _
                $region85: #{featcae_forward.1} parent=82 // loop_header
                  %s438 = sphi 0, %s442
                  %p439 = scmp.ge.s32.totalorder %s438, 1
                  %s443 = sphi %s354, %s354
                  %s444 = sphi %s350, %s350
                $region86: #{featcae_forward.1} parent=82 // loop_header_branch
                  %441 = sbr.rel (%p439) target = $region90
                $region87: #{featcae_forward.1} parent=82 // loop_body
                  %v445 = vld [vmem:[%s443] sm:$0xff]
                  %446 = vst [vmem:[%s444] sm:$0xff] %v445
                  %v447 = vld [vmem:[%s443 + $0x10] sm:$0xff]
                  %448 = vst [vmem:[%s444 + $0x8] sm:$0xff] %v447
                  %v449 = vld [vmem:[%s443 + $0x20] sm:$0xff]
                  %450 = vst [vmem:[%s444 + $0x10] sm:$0xff] %v449
                  %v451 = vld [vmem:[%s443 + $0x30] sm:$0xff]
                  %452 = vst [vmem:[%s444 + $0x18] sm:$0xff] %v451
                  %v453 = vld [vmem:[%s443 + $0x40] sm:$0xff]
                  %454 = vst [vmem:[%s444 + $0x20] sm:$0xff] %v453
                  %v455 = vld [vmem:[%s443 + $0x50] sm:$0xff]
                  %456 = vst [vmem:[%s444 + $0x28] sm:$0xff] %v455
                  %v457 = vld [vmem:[%s443 + $0x60] sm:$0xff]
                  %458 = vst [vmem:[%s444 + $0x30] sm:$0xff] %v457
                  %v459 = vld [vmem:[%s443 + $0x70] sm:$0xff]
                  %460 = vst [vmem:[%s444 + $0x38] sm:$0xff] %v459
                  %v461 = vld [vmem:[%s443 + $0x80] sm:$0xff]
                  %462 = vst [vmem:[%s444 + $0x40] sm:$0xff] %v461
                  %v463 = vld [vmem:[%s443 + $0x90] sm:$0xff]
                  %464 = vst [vmem:[%s444 + $0x48] sm:$0xff] %v463
                  %v465 = vld [vmem:[%s443 + $0xa0] sm:$0xff]
                  %466 = vst [vmem:[%s444 + $0x50] sm:$0xff] %v465
                  %v467 = vld [vmem:[%s443 + $0xb0] sm:$0xff]
                  %468 = vst [vmem:[%s444 + $0x58] sm:$0xff] %v467
                  %v469 = vld [vmem:[%s443 + $0xc0] sm:$0xff]
                  %470 = vst [vmem:[%s444 + $0x60] sm:$0xff] %v469
                  %v471 = vld [vmem:[%s443 + $0xd0] sm:$0xff]
                  %472 = vst [vmem:[%s444 + $0x68] sm:$0xff] %v471
                  %v473 = vld [vmem:[%s443 + $0xe0] sm:$0xff]
                  %474 = vst [vmem:[%s444 + $0x70] sm:$0xff] %v473
                  %v475 = vld [vmem:[%s443 + $0xf0] sm:$0xff]
                  %476 = vst [vmem:[%s444 + $0x78] sm:$0xff] %v475
                  %v477 = vld [vmem:[%s443 + $0x100] sm:$0xff]
                  %478 = vst [vmem:[%s444 + $0x80] sm:$0xff] %v477
                  %v479 = vld [vmem:[%s443 + $0x110] sm:$0xff]
                  %480 = vst [vmem:[%s444 + $0x88] sm:$0xff] %v479
                  %v481 = vld [vmem:[%s443 + $0x120] sm:$0xff]
                  %482 = vst [vmem:[%s444 + $0x90] sm:$0xff] %v481
                  %v483 = vld [vmem:[%s443 + $0x130] sm:$0xff]
                  %484 = vst [vmem:[%s444 + $0x98] sm:$0xff] %v483
                  %v485 = vld [vmem:[%s443 + $0x140] sm:$0xff]
                  %486 = vst [vmem:[%s444 + $0xa0] sm:$0xff] %v485
                  %v487 = vld [vmem:[%s443 + $0x150] sm:$0xff]
                  %488 = vst [vmem:[%s444 + $0xa8] sm:$0xff] %v487
                  %v489 = vld [vmem:[%s443 + $0x160] sm:$0xff]
                  %490 = vst [vmem:[%s444 + $0xb0] sm:$0xff] %v489
                  %v491 = vld [vmem:[%s443 + $0x170] sm:$0xff]
                  %492 = vst [vmem:[%s444 + $0xb8] sm:$0xff] %v491
                  %v493 = vld [vmem:[%s443 + $0x180] sm:$0xff]
                  %494 = vst [vmem:[%s444 + $0xc0] sm:$0xff] %v493
                  %v495 = vld [vmem:[%s443 + $0x190] sm:$0xff]
                  %496 = vst [vmem:[%s444 + $0xc8] sm:$0xff] %v495
                  %v497 = vld [vmem:[%s443 + $0x1a0] sm:$0xff]
                  %498 = vst [vmem:[%s444 + $0xd0] sm:$0xff] %v497
                  %v499 = vld [vmem:[%s443 + $0x1b0] sm:$0xff]
                  %500 = vst [vmem:[%s444 + $0xd8] sm:$0xff] %v499
                  %v501 = vld [vmem:[%s443 + $0x1c0] sm:$0xff]
                  %502 = vst [vmem:[%s444 + $0xe0] sm:$0xff] %v501
                  %v503 = vld [vmem:[%s443 + $0x1d0] sm:$0xff]
                  %504 = vst [vmem:[%s444 + $0xe8] sm:$0xff] %v503
                  %v505 = vld [vmem:[%s443 + $0x1e0] sm:$0xff]
                  %506 = vst [vmem:[%s444 + $0xf0] sm:$0xff] %v505
                  %v507 = vld [vmem:[%s443 + $0x1f0] sm:$0xff]
                  %508 = vst [vmem:[%s444 + $0xf8] sm:$0xff] %v507
                $region88: #{featcae_forward.1} parent=82 // loop_footer
                  %s442 = sadd.s32 1, %s438
                $region89: #{featcae_forward.1} parent=82 // loop_footer_branch
                  %437 = sbr.rel target = $region85
                $region90: #{featcae_forward.1} parent=82 // loop_exit
                  _
              $region83: #{featcae_forward.1} parent=67 // pred_fallthru
                _
              // Predicated region
              $region91: #{featcae_forward.1} parent=67 // pred_check
                _
              $region92: #{featcae_forward.1} parent=67 // pred_check_branch
                %510 = sbr.rel target = $region94
              $region93: #{featcae_forward.1} parent=67 // pred_region
                _
              $region94: #{featcae_forward.1} parent=67 // pred_fallthru
                _
            $region68: #{featcae_forward.1} parent=63 // pred_fallthru
              _
            // Predicated region
            $region69: #{featcae_forward.1} parent=63 // pred_check
              _
            $region70: #{featcae_forward.1} parent=63 // pred_check_branch
              %360 = sbr.rel target = $region72
            $region71: #{featcae_forward.1} parent=63 // pred_region
              %s362 = ssub.s32 256, 1
              loop: start=0, step=1, limit=1
              $region73: #{featcae_forward.1} parent=71 // loop_pre_header
                _
              $region74: #{featcae_forward.1} parent=71 // loop_header
                %s364 = sphi 0, %s368
                %p365 = scmp.ge.s32.totalorder %s364, 1
                %s369 = sphi %s354, %s354
                %s370 = sphi %s350, %s350
              $region75: #{featcae_forward.1} parent=71 // loop_header_branch
                %367 = sbr.rel (%p365) target = $region79
              $region76: #{featcae_forward.1} parent=71 // loop_body
                %v371 = vld [vmem:[%s369] sm:%s362]
                %372 = vst [vmem:[%s370] sm:%s362] %v371
                %v373 = vld [vmem:[%s369 + $0x10] sm:%s362]
                %374 = vst [vmem:[%s370 + $0x8] sm:%s362] %v373
                %v375 = vld [vmem:[%s369 + $0x20] sm:%s362]
                %376 = vst [vmem:[%s370 + $0x10] sm:%s362] %v375
                %v377 = vld [vmem:[%s369 + $0x30] sm:%s362]
                %378 = vst [vmem:[%s370 + $0x18] sm:%s362] %v377
                %v379 = vld [vmem:[%s369 + $0x40] sm:%s362]
                %380 = vst [vmem:[%s370 + $0x20] sm:%s362] %v379
                %v381 = vld [vmem:[%s369 + $0x50] sm:%s362]
                %382 = vst [vmem:[%s370 + $0x28] sm:%s362] %v381
                %v383 = vld [vmem:[%s369 + $0x60] sm:%s362]
                %384 = vst [vmem:[%s370 + $0x30] sm:%s362] %v383
                %v385 = vld [vmem:[%s369 + $0x70] sm:%s362]
                %386 = vst [vmem:[%s370 + $0x38] sm:%s362] %v385
                %v387 = vld [vmem:[%s369 + $0x80] sm:%s362]
                %388 = vst [vmem:[%s370 + $0x40] sm:%s362] %v387
                %v389 = vld [vmem:[%s369 + $0x90] sm:%s362]
                %390 = vst [vmem:[%s370 + $0x48] sm:%s362] %v389
                %v391 = vld [vmem:[%s369 + $0xa0] sm:%s362]
                %392 = vst [vmem:[%s370 + $0x50] sm:%s362] %v391
                %v393 = vld [vmem:[%s369 + $0xb0] sm:%s362]
                %394 = vst [vmem:[%s370 + $0x58] sm:%s362] %v393
                %v395 = vld [vmem:[%s369 + $0xc0] sm:%s362]
                %396 = vst [vmem:[%s370 + $0x60] sm:%s362] %v395
                %v397 = vld [vmem:[%s369 + $0xd0] sm:%s362]
                %398 = vst [vmem:[%s370 + $0x68] sm:%s362] %v397
                %v399 = vld [vmem:[%s369 + $0xe0] sm:%s362]
                %400 = vst [vmem:[%s370 + $0x70] sm:%s362] %v399
                %v401 = vld [vmem:[%s369 + $0xf0] sm:%s362]
                %402 = vst [vmem:[%s370 + $0x78] sm:%s362] %v401
                %v403 = vld [vmem:[%s369 + $0x100] sm:%s362]
                %404 = vst [vmem:[%s370 + $0x80] sm:%s362] %v403
                %v405 = vld [vmem:[%s369 + $0x110] sm:%s362]
                %406 = vst [vmem:[%s370 + $0x88] sm:%s362] %v405
                %v407 = vld [vmem:[%s369 + $0x120] sm:%s362]
                %408 = vst [vmem:[%s370 + $0x90] sm:%s362] %v407
                %v409 = vld [vmem:[%s369 + $0x130] sm:%s362]
                %410 = vst [vmem:[%s370 + $0x98] sm:%s362] %v409
                %v411 = vld [vmem:[%s369 + $0x140] sm:%s362]
                %412 = vst [vmem:[%s370 + $0xa0] sm:%s362] %v411
                %v413 = vld [vmem:[%s369 + $0x150] sm:%s362]
                %414 = vst [vmem:[%s370 + $0xa8] sm:%s362] %v413
                %v415 = vld [vmem:[%s369 + $0x160] sm:%s362]
                %416 = vst [vmem:[%s370 + $0xb0] sm:%s362] %v415
                %v417 = vld [vmem:[%s369 + $0x170] sm:%s362]
                %418 = vst [vmem:[%s370 + $0xb8] sm:%s362] %v417
                %v419 = vld [vmem:[%s369 + $0x180] sm:%s362]
                %420 = vst [vmem:[%s370 + $0xc0] sm:%s362] %v419
                %v421 = vld [vmem:[%s369 + $0x190] sm:%s362]
                %422 = vst [vmem:[%s370 + $0xc8] sm:%s362] %v421
                %v423 = vld [vmem:[%s369 + $0x1a0] sm:%s362]
                %424 = vst [vmem:[%s370 + $0xd0] sm:%s362] %v423
                %v425 = vld [vmem:[%s369 + $0x1b0] sm:%s362]
                %426 = vst [vmem:[%s370 + $0xd8] sm:%s362] %v425
                %v427 = vld [vmem:[%s369 + $0x1c0] sm:%s362]
                %428 = vst [vmem:[%s370 + $0xe0] sm:%s362] %v427
                %v429 = vld [vmem:[%s369 + $0x1d0] sm:%s362]
                %430 = vst [vmem:[%s370 + $0xe8] sm:%s362] %v429
                %v431 = vld [vmem:[%s369 + $0x1e0] sm:%s362]
                %432 = vst [vmem:[%s370 + $0xf0] sm:%s362] %v431
                %v433 = vld [vmem:[%s369 + $0x1f0] sm:%s362]
                %434 = vst [vmem:[%s370 + $0xf8] sm:%s362] %v433
              $region77: #{featcae_forward.1} parent=71 // loop_footer
                %s368 = sadd.s32 1, %s364
              $region78: #{featcae_forward.1} parent=71 // loop_footer_branch
                %363 = sbr.rel target = $region74
              $region79: #{featcae_forward.1} parent=71 // loop_exit
                _
            $region72: #{featcae_forward.1} parent=63 // pred_fallthru
              _
          $region64: #{featcae_forward.1} parent=59 // pred_fallthru
            _
          %511 = vnop
        $region60: #{featcae_forward.1} parent=55 // pred_fallthru
          _
      $region56: #{featcae_forward.1} parent=5 // pred_fallthru
        _
      %p512 = scmp.le.s32.totalorder 1, %s17
      %p513 = scmp.lt.s32.totalorder %s17, 5
      %p514 = pnand %p512, %p513
      %p515 = pneg %p514
      // Predicated region
      $region95: #{featcae_forward.1} parent=5 // pred_check
        _
      $region96: #{featcae_forward.1} parent=5 // pred_check_branch
        %517 = sbr.rel (%p514) target = $region98
      $region97: #{featcae_forward.1} parent=5 // pred_region
        %s518 = ssub.s32 %s17, 1
        %s519 = sand.u32 %s44, 1
        %s520 = sand.u32 %s44, 1
        %s521 = smul.addr %s520, 256
        %s522 = scalar_lea.vmem [#allocation2], %s521
        // Predicated region
        $region99: #{featcae_forward.1} parent=97 // pred_check
          %p523 = pneg %p57
        $region100: #{featcae_forward.1} parent=97 // pred_check_branch
          %525 = sbr.rel (%p523) target = $region102
        $region101: #{featcae_forward.1} parent=97 // pred_region
          _
        $region102: #{featcae_forward.1} parent=97 // pred_fallthru
          _
        %s526 = sand.u32 %s44, 1
        %s527 = sand.u32 %s44, 1
        %s528 = smul.addr %s527, 256
        %s529 = scalar_lea.vmem [#allocation2], %s528
        %p530 = pneg %p57
        %p531 = pneg %p54
        %p532 = pneg %p78
        %p533 = pneg %p75
        %p534 = pneg %p99
        %p535 = pneg %p96
        %p536 = pneg %p120
        %p537 = pneg %p117
        %p538 = pneg %p141
        %p539 = pneg %p138
        %p540 = pneg %p162
        %p541 = pneg %p159
        %p542 = pneg %p183
        %p543 = pneg %p180
        %p544 = pneg %p204
        %p545 = pneg %p201
        %p546 = pneg %p225
        %p547 = pneg %p222
        %p548 = pneg %p246
        %p549 = pneg %p243
        %p550 = pneg %p267
        %p551 = pneg %p264
        %p552 = pneg %p295
        %p553 = pneg %p292
        %s554 = sand.u32 %s282, 1
        %s555 = sand.u32 %s282, 1
        %s556 = smul.addr %s555, 256
        %s557 = scalar_lea.vmem [#allocation3], %s556
        %v558 = vld [vmem:[%s522] sm:$0xff]
        %v559 = vld [vmem:[%s522 + $0x8] sm:$0xff]
        %v560 = vld [vmem:[%s522 + $0x10] sm:$0xff]
        %v561 = vld [vmem:[%s522 + $0x18] sm:$0xff]
        %v562 = vld [vmem:[%s522 + $0x20] sm:$0xff]
        %v563 = vld [vmem:[%s522 + $0x28] sm:$0xff]
        %v564 = vld [vmem:[%s522 + $0x30] sm:$0xff]
        %v565 = vld [vmem:[%s522 + $0x38] sm:$0xff]
        %v566 = vld [vmem:[%s522 + $0x40] sm:$0xff]
        %v567 = vld [vmem:[%s522 + $0x48] sm:$0xff]
        %v568 = vld [vmem:[%s522 + $0x50] sm:$0xff]
        %v569 = vld [vmem:[%s522 + $0x58] sm:$0xff]
        %v570 = vld [vmem:[%s522 + $0x60] sm:$0xff]
        %v571 = vld [vmem:[%s522 + $0x68] sm:$0xff]
        %v572 = vld [vmem:[%s522 + $0x70] sm:$0xff]
        %v573 = vld [vmem:[%s522 + $0x78] sm:$0xff]
        %v574 = vld [vmem:[%s522 + $0x80] sm:$0xff]
        %v575 = vld [vmem:[%s522 + $0x88] sm:$0xff]
        %v576 = vld [vmem:[%s522 + $0x90] sm:$0xff]
        %v577 = vld [vmem:[%s522 + $0x98] sm:$0xff]
        %v578 = vld [vmem:[%s522 + $0xa0] sm:$0xff]
        %v579 = vld [vmem:[%s522 + $0xa8] sm:$0xff]
        %v580 = vld [vmem:[%s522 + $0xb0] sm:$0xff]
        %v581 = vld [vmem:[%s522 + $0xb8] sm:$0xff]
        %v582 = vld [vmem:[%s522 + $0xc0] sm:$0xff]
        %v583 = vld [vmem:[%s522 + $0xc8] sm:$0xff]
        %v584 = vld [vmem:[%s522 + $0xd0] sm:$0xff]
        %v585 = vld [vmem:[%s522 + $0xd8] sm:$0xff]
        %v586 = vld [vmem:[%s522 + $0xe0] sm:$0xff]
        %v587 = vld [vmem:[%s522 + $0xe8] sm:$0xff]
        %v588 = vld [vmem:[%s522 + $0xf0] sm:$0xff]
        %v589 = vld [vmem:[%s522 + $0xf8] sm:$0xff]
        %v590 = vld [vmem:[%s1] sm:$0xff]
        %v591 = vld [vmem:[%s1 + $0x8] sm:$0xff]
        %v592 = vld [vmem:[%s1 + $0x10] sm:$0xff]
        %v593 = vld [vmem:[%s1 + $0x18] sm:$0xff]
        %v594 = vld [vmem:[%s1 + $0x20] sm:$0xff]
        %v595 = vld [vmem:[%s1 + $0x28] sm:$0xff]
        %v596 = vld [vmem:[%s1 + $0x30] sm:$0xff]
        %v597 = vld [vmem:[%s1 + $0x38] sm:$0xff]
        %v598 = vld [vmem:[%s1 + $0x40] sm:$0xff]
        %v599 = vld [vmem:[%s1 + $0x48] sm:$0xff]
        %v600 = vld [vmem:[%s1 + $0x50] sm:$0xff]
        %v601 = vld [vmem:[%s1 + $0x58] sm:$0xff]
        %v602 = vld [vmem:[%s1 + $0x60] sm:$0xff]
        %v603 = vld [vmem:[%s1 + $0x68] sm:$0xff]
        %v604 = vld [vmem:[%s1 + $0x70] sm:$0xff]
        %v605 = vld [vmem:[%s1 + $0x78] sm:$0xff]
        %v606 = vld [vmem:[%s1 + $0x80] sm:$0xff]
        %v607 = vld [vmem:[%s1 + $0x88] sm:$0xff]
        %v608 = vld [vmem:[%s1 + $0x90] sm:$0xff]
        %v609 = vld [vmem:[%s1 + $0x98] sm:$0xff]
        %v610 = vld [vmem:[%s1 + $0xa0] sm:$0xff]
        %v611 = vld [vmem:[%s1 + $0xa8] sm:$0xff]
        %v612 = vld [vmem:[%s1 + $0xb0] sm:$0xff]
        %v613 = vld [vmem:[%s1 + $0xb8] sm:$0xff]
        %v614 = vld [vmem:[%s1 + $0xc0] sm:$0xff]
        %v615 = vld [vmem:[%s1 + $0xc8] sm:$0xff]
        %v616 = vld [vmem:[%s1 + $0xd0] sm:$0xff]
        %v617 = vld [vmem:[%s1 + $0xd8] sm:$0xff]
        %v618 = vld [vmem:[%s1 + $0xe0] sm:$0xff]
        %v619 = vld [vmem:[%s1 + $0xe8] sm:$0xff]
        %v620 = vld [vmem:[%s1 + $0xf0] sm:$0xff]
        %v621 = vld [vmem:[%s1 + $0xf8] sm:$0xff]
        %v622 = vld [vmem:[%s1 + $0x100] sm:$0xff]
        %v623 = vld [vmem:[%s1 + $0x108] sm:$0xff]
        %v624 = vld [vmem:[%s1 + $0x110] sm:$0xff]
        %v625 = vld [vmem:[%s1 + $0x118] sm:$0xff]
        %v626 = vld [vmem:[%s1 + $0x120] sm:$0xff]
        %v627 = vld [vmem:[%s1 + $0x128] sm:$0xff]
        %v628 = vld [vmem:[%s1 + $0x130] sm:$0xff]
        %v629 = vld [vmem:[%s1 + $0x138] sm:$0xff]
        %v630 = vld [vmem:[%s2] sm:$0xff]
        %v631 = vld [vmem:[%s2 + $0x8] sm:$0xff]
        %v632 = vld [vmem:[%s2 + $0x10] sm:$0xff]
        %v633 = vld [vmem:[%s2 + $0x18] sm:$0xff]
        %v634 = vld [vmem:[%s2 + $0x20] sm:$0xff]
        %v635 = vld [vmem:[%s2 + $0x28] sm:$0xff]
        %v636 = vld [vmem:[%s2 + $0x30] sm:$0xff]
        %v637 = vld [vmem:[%s2 + $0x38] sm:$0xff]
        %v638 = vld [vmem:[%s2 + $0x40] sm:$0xff]
        %v639 = vld [vmem:[%s2 + $0x48] sm:$0xff]
        %v640 = vld [vmem:[%s2 + $0x50] sm:$0xff]
        %v641 = vld [vmem:[%s2 + $0x58] sm:$0xff]
        %v642 = vld [vmem:[%s2 + $0x60] sm:$0xff]
        %v643 = vld [vmem:[%s2 + $0x68] sm:$0xff]
        %v644 = vld [vmem:[%s2 + $0x70] sm:$0xff]
        %v645 = vld [vmem:[%s2 + $0x78] sm:$0xff]
        %v646 = vld [vmem:[%s2 + $0x80] sm:$0xff]
        %v647 = vld [vmem:[%s2 + $0x88] sm:$0xff]
        %v648 = vld [vmem:[%s2 + $0x90] sm:$0xff]
        %v649 = vld [vmem:[%s2 + $0x98] sm:$0xff]
        %651 = vset.pattern.permute.xlu0 0
        %652 = vperm.xlu0 %651, %v630
        %v653 = vpop.permute.xlu0 %652
        %656 = vset.pattern.permute.xlu0 0
        %657 = vperm.xlu0 %656, %v631
        %v658 = vpop.permute.xlu0 %657
        %661 = vset.pattern.permute.xlu0 0
        %662 = vperm.xlu0 %661, %v632
        %v663 = vpop.permute.xlu0 %662
        %666 = vset.pattern.permute.xlu0 0
        %667 = vperm.xlu0 %666, %v633
        %v668 = vpop.permute.xlu0 %667
        %671 = vset.pattern.permute.xlu0 0
        %672 = vperm.xlu0 %671, %v634
        %v673 = vpop.permute.xlu0 %672
        %676 = vset.pattern.permute.xlu0 0
        %677 = vperm.xlu0 %676, %v635
        %v678 = vpop.permute.xlu0 %677
        %681 = vset.pattern.permute.xlu0 0
        %682 = vperm.xlu0 %681, %v636
        %v683 = vpop.permute.xlu0 %682
        %686 = vset.pattern.permute.xlu0 0
        %687 = vperm.xlu0 %686, %v637
        %v688 = vpop.permute.xlu0 %687
        %691 = vset.pattern.permute.xlu0 0
        %692 = vperm.xlu0 %691, %v638
        %v693 = vpop.permute.xlu0 %692
        %696 = vset.pattern.permute.xlu0 0
        %697 = vperm.xlu0 %696, %v639
        %v698 = vpop.permute.xlu0 %697
        %701 = vset.pattern.permute.xlu0 0
        %702 = vperm.xlu0 %701, %v640
        %v703 = vpop.permute.xlu0 %702
        %706 = vset.pattern.permute.xlu0 0
        %707 = vperm.xlu0 %706, %v641
        %v708 = vpop.permute.xlu0 %707
        %711 = vset.pattern.permute.xlu0 0
        %712 = vperm.xlu0 %711, %v642
        %v713 = vpop.permute.xlu0 %712
        %716 = vset.pattern.permute.xlu0 0
        %717 = vperm.xlu0 %716, %v643
        %v718 = vpop.permute.xlu0 %717
        %721 = vset.pattern.permute.xlu0 0
        %722 = vperm.xlu0 %721, %v644
        %v723 = vpop.permute.xlu0 %722
        %726 = vset.pattern.permute.xlu0 0
        %727 = vperm.xlu0 %726, %v645
        %v728 = vpop.permute.xlu0 %727
        %731 = vset.pattern.permute.xlu0 0
        %732 = vperm.xlu0 %731, %v646
        %v733 = vpop.permute.xlu0 %732
        %736 = vset.pattern.permute.xlu0 0
        %737 = vperm.xlu0 %736, %v647
        %v738 = vpop.permute.xlu0 %737
        %741 = vset.pattern.permute.xlu0 0
        %742 = vperm.xlu0 %741, %v648
        %v743 = vpop.permute.xlu0 %742
        %746 = vset.pattern.permute.xlu0 0
        %747 = vperm.xlu0 %746, %v649
        %v748 = vpop.permute.xlu0 %747
        %750 = vmatprep.subr.mxu0 0.0
        %751 = vmatpush1.msra.mxu0 %v573
        %752 = vmatprep.subr.mxu0 0.0
        %753 = vmatpush1.msra.mxu0 %v572
        %754 = vmatprep.subr.mxu0 0.0
        %755 = vmatpush1.msra.mxu0 %v571
        %756 = vmatprep.subr.mxu0 0.0
        %757 = vmatpush1.msra.mxu0 %v570
        %758 = vmatprep.subr.mxu0 0.0
        %759 = vmatpush1.msra.mxu0 %v569
        %760 = vmatprep.subr.mxu0 0.0
        %761 = vmatpush1.msra.mxu0 %v568
        %762 = vmatprep.subr.mxu0 0.0
        %763 = vmatpush1.msra.mxu0 %v567
        %764 = vmatprep.subr.mxu0 0.0
        %765 = vmatpush1.msra.mxu0 %v566
        %766 = vmatprep.subr.mxu0 0.0
        %767 = vmatpush1.msra.mxu0 %v565
        %768 = vmatprep.subr.mxu0 0.0
        %769 = vmatpush1.msra.mxu0 %v564
        %770 = vmatprep.subr.mxu0 0.0
        %771 = vmatpush1.msra.mxu0 %v563
        %772 = vmatprep.subr.mxu0 0.0
        %773 = vmatpush1.msra.mxu0 %v562
        %774 = vmatprep.subr.mxu0 0.0
        %775 = vmatpush1.msra.mxu0 %v561
        %776 = vmatprep.subr.mxu0 0.0
        %777 = vmatpush1.msra.mxu0 %v560
        %778 = vmatprep.subr.mxu0 0.0
        %779 = vmatpush1.msra.mxu0 %v559
        %780 = vmatprep.subr.mxu0 0.0
        %781 = vmatpush1.msra.mxu0 %v558
        %782 = vmatprep.subr.mxu0 0.0
        %783 = vmatpush2.msra.mxu0 %v589
        %784 = vmatprep.subr.mxu0 0.0
        %785 = vmatpush2.msra.mxu0 %v588
        %786 = vmatprep.subr.mxu0 0.0
        %787 = vmatpush2.msra.mxu0 %v587
        %788 = vmatprep.subr.mxu0 0.0
        %789 = vmatpush2.msra.mxu0 %v586
        %790 = vmatprep.subr.mxu0 0.0
        %791 = vmatpush2.msra.mxu0 %v585
        %792 = vmatprep.subr.mxu0 0.0
        %793 = vmatpush2.msra.mxu0 %v584
        %794 = vmatprep.subr.mxu0 0.0
        %795 = vmatpush2.msra.mxu0 %v583
        %796 = vmatprep.subr.mxu0 0.0
        %797 = vmatpush2.msra.mxu0 %v582
        %798 = vmatprep.subr.mxu0 0.0
        %799 = vmatpush2.msra.mxu0 %v581
        %800 = vmatprep.subr.mxu0 0.0
        %801 = vmatpush2.msra.mxu0 %v580
        %802 = vmatprep.subr.mxu0 0.0
        %803 = vmatpush2.msra.mxu0 %v579
        %804 = vmatprep.subr.mxu0 0.0
        %805 = vmatpush2.msra.mxu0 %v578
        %806 = vmatprep.subr.mxu0 0.0
        %807 = vmatpush2.msra.mxu0 %v577
        %808 = vmatprep.subr.mxu0 0.0
        %809 = vmatpush2.msra.mxu0 %v576
        %810 = vmatprep.subr.mxu0 0.0
        %811 = vmatpush2.msra.mxu0 %v575
        %812 = vmatprep.subr.mxu0 0.0
        %813 = vmatpush2.msra.mxu0 %v574
        %814 = vmatprep.mubr.f32.mxu0 %v591
        %815 = vmatmul.mubr.f32.gmra.mxu0 %v590
        %v816 = vpop.f32.mrf.mxu0
        %v817 = vadd.f32 %v653, %v816
        %v818 = vpop.f32.mrf.mxu0
        %819 = vmatprep.mubr.f32.mxu0 %v593
        %820 = vmatmul.mubr.f32.gmra.mxu0 %v592
        %v821 = vpop.f32.mrf.mxu0
        %v822 = vadd.f32 %v658, %v821
        %v823 = vpop.f32.mrf.mxu0
        %824 = vmatprep.mubr.f32.mxu0 %v595
        %825 = vmatmul.mubr.f32.gmra.mxu0 %v594
        %v826 = vpop.f32.mrf.mxu0
        %v827 = vadd.f32 %v663, %v826
        %v828 = vpop.f32.mrf.mxu0
        %829 = vmatprep.mubr.f32.mxu0 %v597
        %830 = vmatmul.mubr.f32.gmra.mxu0 %v596
        %v831 = vpop.f32.mrf.mxu0
        %v832 = vadd.f32 %v668, %v831
        %v833 = vpop.f32.mrf.mxu0
        %834 = vmatprep.mubr.f32.mxu0 %v599
        %835 = vmatmul.mubr.f32.gmra.mxu0 %v598
        %v836 = vpop.f32.mrf.mxu0
        %v837 = vadd.f32 %v673, %v836
        %v838 = vpop.f32.mrf.mxu0
        %839 = vmatprep.mubr.f32.mxu0 %v601
        %840 = vmatmul.mubr.f32.gmra.mxu0 %v600
        %v841 = vpop.f32.mrf.mxu0
        %v842 = vadd.f32 %v678, %v841
        %v843 = vpop.f32.mrf.mxu0
        %844 = vmatprep.mubr.f32.mxu0 %v603
        %845 = vmatmul.mubr.f32.gmra.mxu0 %v602
        %v846 = vpop.f32.mrf.mxu0
        %v847 = vadd.f32 %v683, %v846
        %v848 = vpop.f32.mrf.mxu0
        %849 = vmatprep.mubr.f32.mxu0 %v605
        %850 = vmatmul.mubr.f32.gmra.mxu0 %v604
        %v851 = vpop.f32.mrf.mxu0
        %v852 = vadd.f32 %v688, %v851
        %v853 = vpop.f32.mrf.mxu0
        %854 = vmatprep.mubr.f32.mxu0 %v607
        %855 = vmatmul.mubr.f32.gmra.mxu0 %v606
        %v856 = vpop.f32.mrf.mxu0
        %v857 = vadd.f32 %v693, %v856
        %v858 = vpop.f32.mrf.mxu0
        %859 = vmatprep.mubr.f32.mxu0 %v609
        %860 = vmatmul.mubr.f32.gmra.mxu0 %v608
        %v861 = vpop.f32.mrf.mxu0
        %v862 = vadd.f32 %v698, %v861
        %v863 = vpop.f32.mrf.mxu0
        %864 = vmatprep.mubr.f32.mxu0 %v611
        %865 = vmatmul.mubr.f32.gmra.mxu0 %v610
        %v866 = vpop.f32.mrf.mxu0
        %v867 = vadd.f32 %v703, %v866
        %v868 = vpop.f32.mrf.mxu0
        %869 = vmatprep.mubr.f32.mxu0 %v613
        %870 = vmatmul.mubr.f32.gmra.mxu0 %v612
        %v871 = vpop.f32.mrf.mxu0
        %v872 = vadd.f32 %v708, %v871
        %v873 = vpop.f32.mrf.mxu0
        %874 = vmatprep.mubr.f32.mxu0 %v615
        %875 = vmatmul.mubr.f32.gmra.mxu0 %v614
        %v876 = vpop.f32.mrf.mxu0
        %v877 = vadd.f32 %v713, %v876
        %v878 = vpop.f32.mrf.mxu0
        %879 = vmatprep.mubr.f32.mxu0 %v617
        %880 = vmatmul.mubr.f32.gmra.mxu0 %v616
        %v881 = vpop.f32.mrf.mxu0
        %v882 = vadd.f32 %v718, %v881
        %v883 = vpop.f32.mrf.mxu0
        %884 = vmatprep.mubr.f32.mxu0 %v619
        %885 = vmatmul.mubr.f32.gmra.mxu0 %v618
        %v886 = vpop.f32.mrf.mxu0
        %v887 = vadd.f32 %v723, %v886
        %v888 = vpop.f32.mrf.mxu0
        %889 = vmatprep.mubr.f32.mxu0 %v621
        %890 = vmatmul.mubr.f32.gmra.mxu0 %v620
        %v891 = vpop.f32.mrf.mxu0
        %v892 = vadd.f32 %v728, %v891
        %v893 = vpop.f32.mrf.mxu0
        %894 = vmatprep.mubr.f32.mxu0 %v623
        %895 = vmatmul.mubr.f32.gmra.mxu0 %v622
        %v896 = vpop.f32.mrf.mxu0
        %v897 = vadd.f32 %v733, %v896
        %v898 = vpop.f32.mrf.mxu0
        %899 = vmatprep.mubr.f32.mxu0 %v625
        %900 = vmatmul.mubr.f32.gmra.mxu0 %v624
        %v901 = vpop.f32.mrf.mxu0
        %v902 = vadd.f32 %v738, %v901
        %v903 = vpop.f32.mrf.mxu0
        %904 = vmatprep.mubr.f32.mxu0 %v627
        %905 = vmatmul.mubr.f32.gmra.mxu0 %v626
        %v906 = vpop.f32.mrf.mxu0
        %v907 = vadd.f32 %v743, %v906
        %v908 = vpop.f32.mrf.mxu0
        %909 = vmatprep.mubr.f32.mxu0 %v629
        %910 = vmatmul.mubr.f32.gmra.mxu0 %v628
        %v911 = vpop.f32.mrf.mxu0
        %v912 = vadd.f32 %v748, %v911
        %v913 = vpop.f32.mrf.mxu0
        %914 = vdwg.mxu0
        %v915 = vmax.f32 %v817, 0.0
        %v916 = vmax.f32 %v822, 0.0
        %v917 = vmax.f32 %v827, 0.0
        %v918 = vmax.f32 %v832, 0.0
        %v919 = vmax.f32 %v837, 0.0
        %v920 = vmax.f32 %v842, 0.0
        %v921 = vmax.f32 %v847, 0.0
        %v922 = vmax.f32 %v852, 0.0
        %v923 = vmax.f32 %v857, 0.0
        %v924 = vmax.f32 %v862, 0.0
        %v925 = vmax.f32 %v867, 0.0
        %v926 = vmax.f32 %v872, 0.0
        %v927 = vmax.f32 %v877, 0.0
        %v928 = vmax.f32 %v882, 0.0
        %v929 = vmax.f32 %v887, 0.0
        %v930 = vmax.f32 %v892, 0.0
        %v931 = vmax.f32 %v897, 0.0
        %v932 = vmax.f32 %v902, 0.0
        %v933 = vmax.f32 %v907, 0.0
        %v934 = vmax.f32 %v912, 0.0
        %v935 = vld [vmem:[%s3] sm:$0xff]
        %v936 = vld [vmem:[%s3 + $0x8] sm:$0xff]
        %v937 = vld [vmem:[%s3 + $0x10] sm:$0xff]
        %v938 = vld [vmem:[%s3 + $0x18] sm:$0xff]
        %v939 = vld [vmem:[%s3 + $0x20] sm:$0xff]
        %v940 = vld [vmem:[%s3 + $0x28] sm:$0xff]
        %v941 = vld [vmem:[%s3 + $0x30] sm:$0xff]
        %v942 = vld [vmem:[%s3 + $0x38] sm:$0xff]
        %v943 = vld [vmem:[%s3 + $0x40] sm:$0xff]
        %v944 = vld [vmem:[%s3 + $0x48] sm:$0xff]
        %v945 = vld [vmem:[%s3 + $0x50] sm:$0xff]
        %v946 = vld [vmem:[%s3 + $0x58] sm:$0xff]
        %v947 = vld [vmem:[%s3 + $0x60] sm:$0xff]
        %v948 = vld [vmem:[%s3 + $0x68] sm:$0xff]
        %v949 = vld [vmem:[%s3 + $0x70] sm:$0xff]
        %v950 = vld [vmem:[%s3 + $0x78] sm:$0xff]
        %v951 = vld [vmem:[%s4] sm:$0xff]
        %v952 = vld [vmem:[%s4 + $0x8] sm:$0xff]
        %v953 = vld [vmem:[%s4 + $0x10] sm:$0xff]
        %v954 = vld [vmem:[%s4 + $0x18] sm:$0xff]
        %v955 = vld [vmem:[%s4 + $0x20] sm:$0xff]
        %v956 = vld [vmem:[%s4 + $0x28] sm:$0xff]
        %v957 = vld [vmem:[%s4 + $0x30] sm:$0xff]
        %v958 = vld [vmem:[%s4 + $0x38] sm:$0xff]
        %960 = vset.pattern.permute.xlu0 0
        %961 = vperm.xlu0 %960, %v951
        %v962 = vpop.permute.xlu0 %961
        %965 = vset.pattern.permute.xlu0 0
        %966 = vperm.xlu0 %965, %v952
        %v967 = vpop.permute.xlu0 %966
        %970 = vset.pattern.permute.xlu0 0
        %971 = vperm.xlu0 %970, %v953
        %v972 = vpop.permute.xlu0 %971
        %975 = vset.pattern.permute.xlu0 0
        %976 = vperm.xlu0 %975, %v954
        %v977 = vpop.permute.xlu0 %976
        %980 = vset.pattern.permute.xlu0 0
        %981 = vperm.xlu0 %980, %v955
        %v982 = vpop.permute.xlu0 %981
        %985 = vset.pattern.permute.xlu0 0
        %986 = vperm.xlu0 %985, %v956
        %v987 = vpop.permute.xlu0 %986
        %990 = vset.pattern.permute.xlu0 0
        %991 = vperm.xlu0 %990, %v957
        %v992 = vpop.permute.xlu0 %991
        %995 = vset.pattern.permute.xlu0 0
        %996 = vperm.xlu0 %995, %v958
        %v997 = vpop.permute.xlu0 %996
        %vm999 = vcmask 261120
        %v1001 = vsel %vm999, %v936, 0
        %v1004 = vsel %vm999, %v938, 0
        %v1007 = vsel %vm999, %v940, 0
        %v1010 = vsel %vm999, %v942, 0
        %v1013 = vsel %vm999, %v944, 0
        %v1016 = vsel %vm999, %v946, 0
        %v1019 = vsel %vm999, %v948, 0
        %v1022 = vsel %vm999, %v950, 0
        %1024 = vmatprep.subr.mxu0 0.0
        %1025 = vmatpush1.msra.mxu0 %v930
        %1026 = vmatprep.subr.mxu0 0.0
        %1027 = vmatpush1.msra.mxu0 %v929
        %1028 = vmatprep.subr.mxu0 0.0
        %1029 = vmatpush1.msra.mxu0 %v928
        %1030 = vmatprep.subr.mxu0 0.0
        %1031 = vmatpush1.msra.mxu0 %v927
        %1032 = vmatprep.subr.mxu0 0.0
        %1033 = vmatpush1.msra.mxu0 %v926
        %1034 = vmatprep.subr.mxu0 0.0
        %1035 = vmatpush1.msra.mxu0 %v925
        %1036 = vmatprep.subr.mxu0 0.0
        %1037 = vmatpush1.msra.mxu0 %v924
        %1038 = vmatprep.subr.mxu0 0.0
        %1039 = vmatpush1.msra.mxu0 %v923
        %1040 = vmatprep.subr.mxu0 0.0
        %1041 = vmatpush1.msra.mxu0 %v922
        %1042 = vmatprep.subr.mxu0 0.0
        %1043 = vmatpush1.msra.mxu0 %v921
        %1044 = vmatprep.subr.mxu0 0.0
        %1045 = vmatpush1.msra.mxu0 %v920
        %1046 = vmatprep.subr.mxu0 0.0
        %1047 = vmatpush1.msra.mxu0 %v919
        %1048 = vmatprep.subr.mxu0 0.0
        %1049 = vmatpush1.msra.mxu0 %v918
        %1050 = vmatprep.subr.mxu0 0.0
        %1051 = vmatpush1.msra.mxu0 %v917
        %1052 = vmatprep.subr.mxu0 0.0
        %1053 = vmatpush1.msra.mxu0 %v916
        %1054 = vmatprep.subr.mxu0 0.0
        %1055 = vmatpush1.msra.mxu0 %v915
        %1056 = vmatprep.subr.mxu0 0.0
        %1057 = vmatpush2.msra.mxu0 0.0
        %1058 = vmatprep.subr.mxu0 0.0
        %1059 = vmatpush2.msra.mxu0 0.0
        %1060 = vmatprep.subr.mxu0 0.0
        %1061 = vmatpush2.msra.mxu0 0.0
        %1062 = vmatprep.subr.mxu0 0.0
        %1063 = vmatpush2.msra.mxu0 0.0
        %1064 = vmatprep.subr.mxu0 0.0
        %1065 = vmatpush2.msra.mxu0 0.0
        %1066 = vmatprep.subr.mxu0 0.0
        %1067 = vmatpush2.msra.mxu0 0.0
        %1068 = vmatprep.subr.mxu0 0.0
        %1069 = vmatpush2.msra.mxu0 0.0
        %1070 = vmatprep.subr.mxu0 0.0
        %1071 = vmatpush2.msra.mxu0 0.0
        %1072 = vmatprep.subr.mxu0 0.0
        %1073 = vmatpush2.msra.mxu0 0.0
        %1074 = vmatprep.subr.mxu0 0.0
        %1075 = vmatpush2.msra.mxu0 0.0
        %1076 = vmatprep.subr.mxu0 0.0
        %1077 = vmatpush2.msra.mxu0 0.0
        %1078 = vmatprep.subr.mxu0 0.0
        %1079 = vmatpush2.msra.mxu0 0.0
        %1080 = vmatprep.subr.mxu0 0.0
        %1081 = vmatpush2.msra.mxu0 %v934
        %1082 = vmatprep.subr.mxu0 0.0
        %1083 = vmatpush2.msra.mxu0 %v933
        %1084 = vmatprep.subr.mxu0 0.0
        %1085 = vmatpush2.msra.mxu0 %v932
        %1086 = vmatprep.subr.mxu0 0.0
        %1087 = vmatpush2.msra.mxu0 %v931
        %1088 = vmatprep.mubr.f32.mxu0 %v1001
        %1089 = vmatmul.mubr.f32.gmra.mxu0 %v935
        %v1090 = vpop.f32.mrf.mxu0
        %v1091 = vadd.f32 %v962, %v1090
        %v1092 = vpop.f32.mrf.mxu0
        %1093 = vmatprep.mubr.f32.mxu0 %v1004
        %1094 = vmatmul.mubr.f32.gmra.mxu0 %v937
        %v1095 = vpop.f32.mrf.mxu0
        %v1096 = vadd.f32 %v967, %v1095
        %v1097 = vpop.f32.mrf.mxu0
        %1098 = vmatprep.mubr.f32.mxu0 %v1007
        %1099 = vmatmul.mubr.f32.gmra.mxu0 %v939
        %v1100 = vpop.f32.mrf.mxu0
        %v1101 = vadd.f32 %v972, %v1100
        %v1102 = vpop.f32.mrf.mxu0
        %1103 = vmatprep.mubr.f32.mxu0 %v1010
        %1104 = vmatmul.mubr.f32.gmra.mxu0 %v941
        %v1105 = vpop.f32.mrf.mxu0
        %v1106 = vadd.f32 %v977, %v1105
        %v1107 = vpop.f32.mrf.mxu0
        %1108 = vmatprep.mubr.f32.mxu0 %v1013
        %1109 = vmatmul.mubr.f32.gmra.mxu0 %v943
        %v1110 = vpop.f32.mrf.mxu0
        %v1111 = vadd.f32 %v982, %v1110
        %v1112 = vpop.f32.mrf.mxu0
        %1113 = vmatprep.mubr.f32.mxu0 %v1016
        %1114 = vmatmul.mubr.f32.gmra.mxu0 %v945
        %v1115 = vpop.f32.mrf.mxu0
        %v1116 = vadd.f32 %v987, %v1115
        %v1117 = vpop.f32.mrf.mxu0
        %1118 = vmatprep.mubr.f32.mxu0 %v1019
        %1119 = vmatmul.mubr.f32.gmra.mxu0 %v947
        %v1120 = vpop.f32.mrf.mxu0
        %v1121 = vadd.f32 %v992, %v1120
        %v1122 = vpop.f32.mrf.mxu0
        %1123 = vmatprep.mubr.f32.mxu0 %v1022
        %1124 = vmatmul.mubr.f32.gmra.mxu0 %v949
        %v1125 = vpop.f32.mrf.mxu0
        %v1126 = vadd.f32 %v997, %v1125
        %v1127 = vpop.f32.mrf.mxu0
        %1128 = vdwg.mxu0
        %v1129 = vmax.f32 %v1091, 0.0
        %v1130 = vmax.f32 %v1096, 0.0
        %v1131 = vmax.f32 %v1101, 0.0
        %v1132 = vmax.f32 %v1106, 0.0
        %v1133 = vmax.f32 %v1111, 0.0
        %v1134 = vmax.f32 %v1116, 0.0
        %v1135 = vmax.f32 %v1121, 0.0
        %v1136 = vmax.f32 %v1126, 0.0
        %v1137 = vld [vmem:[%s5] sm:$0xff]
        %v1138 = vld [vmem:[%s5 + $0x8] sm:$0xff]
        %v1139 = vld [vmem:[%s5 + $0x10] sm:$0xff]
        %v1140 = vld [vmem:[%s5 + $0x18] sm:$0xff]
        %v1141 = vld [vmem:[%s5 + $0x20] sm:$0xff]
        %v1142 = vld [vmem:[%s5 + $0x28] sm:$0xff]
        %v1143 = vld [vmem:[%s5 + $0x30] sm:$0xff]
        %v1144 = vld [vmem:[%s5 + $0x38] sm:$0xff]
        %v1145 = vld [vmem:[%s6] sm:$0xff]
        %v1146 = vld [vmem:[%s6 + $0x8] sm:$0xff]
        %v1147 = vld [vmem:[%s6 + $0x10] sm:$0xff]
        %v1148 = vld [vmem:[%s6 + $0x18] sm:$0xff]
        %v1149 = vld [vmem:[%s6 + $0x20] sm:$0xff]
        %v1150 = vld [vmem:[%s6 + $0x28] sm:$0xff]
        %v1151 = vld [vmem:[%s6 + $0x30] sm:$0xff]
        %v1152 = vld [vmem:[%s6 + $0x38] sm:$0xff]
        %1154 = vset.pattern.permute.xlu0 0
        %1155 = vperm.xlu0 %1154, %v1145
        %v1156 = vpop.permute.xlu0 %1155
        %1159 = vset.pattern.permute.xlu0 0
        %1160 = vperm.xlu0 %1159, %v1146
        %v1161 = vpop.permute.xlu0 %1160
        %1164 = vset.pattern.permute.xlu0 0
        %1165 = vperm.xlu0 %1164, %v1147
        %v1166 = vpop.permute.xlu0 %1165
        %1169 = vset.pattern.permute.xlu0 0
        %1170 = vperm.xlu0 %1169, %v1148
        %v1171 = vpop.permute.xlu0 %1170
        %1174 = vset.pattern.permute.xlu0 0
        %1175 = vperm.xlu0 %1174, %v1149
        %v1176 = vpop.permute.xlu0 %1175
        %1179 = vset.pattern.permute.xlu0 0
        %1180 = vperm.xlu0 %1179, %v1150
        %v1181 = vpop.permute.xlu0 %1180
        %1184 = vset.pattern.permute.xlu0 0
        %1185 = vperm.xlu0 %1184, %v1151
        %v1186 = vpop.permute.xlu0 %1185
        %1189 = vset.pattern.permute.xlu0 0
        %1190 = vperm.xlu0 %1189, %v1152
        %v1191 = vpop.permute.xlu0 %1190
        %vm1193 = vcmask 523264
        %v1195 = vsel %vm1193, %v1137, 0
        %v1198 = vsel %vm1193, %v1138, 0
        %v1201 = vsel %vm1193, %v1139, 0
        %v1204 = vsel %vm1193, %v1140, 0
        %v1207 = vsel %vm1193, %v1141, 0
        %v1210 = vsel %vm1193, %v1142, 0
        %v1213 = vsel %vm1193, %v1143, 0
        %v1216 = vsel %vm1193, %v1144, 0
        %1218 = vmatprep.subr.mxu0 0.0
        %1219 = vmatpush1.msra.mxu0 0.0
        %1220 = vmatprep.subr.mxu0 0.0
        %1221 = vmatpush1.msra.mxu0 0.0
        %1222 = vmatprep.subr.mxu0 0.0
        %1223 = vmatpush1.msra.mxu0 0.0
        %1224 = vmatprep.subr.mxu0 0.0
        %1225 = vmatpush1.msra.mxu0 0.0
        %1226 = vmatprep.subr.mxu0 0.0
        %1227 = vmatpush1.msra.mxu0 0.0
        %1228 = vmatprep.subr.mxu0 0.0
        %1229 = vmatpush1.msra.mxu0 0.0
        %1230 = vmatprep.subr.mxu0 0.0
        %1231 = vmatpush1.msra.mxu0 0.0
        %1232 = vmatprep.subr.mxu0 0.0
        %1233 = vmatpush1.msra.mxu0 0.0
        %1234 = vmatprep.subr.mxu0 0.0
        %1235 = vmatpush1.msra.mxu0 %v1136
        %1236 = vmatprep.subr.mxu0 0.0
        %1237 = vmatpush1.msra.mxu0 %v1135
        %1238 = vmatprep.subr.mxu0 0.0
        %1239 = vmatpush1.msra.mxu0 %v1134
        %1240 = vmatprep.subr.mxu0 0.0
        %1241 = vmatpush1.msra.mxu0 %v1133
        %1242 = vmatprep.subr.mxu0 0.0
        %1243 = vmatpush1.msra.mxu0 %v1132
        %1244 = vmatprep.subr.mxu0 0.0
        %1245 = vmatpush1.msra.mxu0 %v1131
        %1246 = vmatprep.subr.mxu0 0.0
        %1247 = vmatpush1.msra.mxu0 %v1130
        %1248 = vmatprep.subr.mxu0 0.0
        %1249 = vmatpush1.msra.mxu0 %v1129
        %1250 = vmatprep.subr.mxu0 0.0
        %1251 = vmatpush2.msra.mxu0 0.0
        %1252 = vmatprep.subr.mxu0 0.0
        %1253 = vmatpush2.msra.mxu0 0.0
        %1254 = vmatprep.subr.mxu0 0.0
        %1255 = vmatpush2.msra.mxu0 0.0
        %1256 = vmatprep.subr.mxu0 0.0
        %1257 = vmatpush2.msra.mxu0 0.0
        %1258 = vmatprep.subr.mxu0 0.0
        %1259 = vmatpush2.msra.mxu0 0.0
        %1260 = vmatprep.subr.mxu0 0.0
        %1261 = vmatpush2.msra.mxu0 0.0
        %1262 = vmatprep.subr.mxu0 0.0
        %1263 = vmatpush2.msra.mxu0 0.0
        %1264 = vmatprep.subr.mxu0 0.0
        %1265 = vmatpush2.msra.mxu0 0.0
        %1266 = vmatprep.subr.mxu0 0.0
        %1267 = vmatpush2.msra.mxu0 0.0
        %1268 = vmatprep.subr.mxu0 0.0
        %1269 = vmatpush2.msra.mxu0 0.0
        %1270 = vmatprep.subr.mxu0 0.0
        %1271 = vmatpush2.msra.mxu0 0.0
        %1272 = vmatprep.subr.mxu0 0.0
        %1273 = vmatpush2.msra.mxu0 0.0
        %1274 = vmatprep.subr.mxu0 0.0
        %1275 = vmatpush2.msra.mxu0 0.0
        %1276 = vmatprep.subr.mxu0 0.0
        %1277 = vmatpush2.msra.mxu0 0.0
        %1278 = vmatprep.subr.mxu0 0.0
        %1279 = vmatpush2.msra.mxu0 0.0
        %1280 = vmatprep.subr.mxu0 0.0
        %1281 = vmatpush2.msra.mxu0 0.0
        %1282 = vmatprep.mubr.f32.mxu0 0.0
        %1283 = vmatmul.mubr.f32.gmra.mxu0 %v1195
        %v1284 = vpop.f32.mrf.mxu0
        %v1285 = vadd.f32 %v1156, %v1284
        %v1286 = vpop.f32.mrf.mxu0
        %1287 = vmatprep.mubr.f32.mxu0 0.0
        %1288 = vmatmul.mubr.f32.gmra.mxu0 %v1198
        %v1289 = vpop.f32.mrf.mxu0
        %v1290 = vadd.f32 %v1161, %v1289
        %v1291 = vpop.f32.mrf.mxu0
        %1292 = vmatprep.mubr.f32.mxu0 0.0
        %1293 = vmatmul.mubr.f32.gmra.mxu0 %v1201
        %v1294 = vpop.f32.mrf.mxu0
        %v1295 = vadd.f32 %v1166, %v1294
        %v1296 = vpop.f32.mrf.mxu0
        %1297 = vmatprep.mubr.f32.mxu0 0.0
        %1298 = vmatmul.mubr.f32.gmra.mxu0 %v1204
        %v1299 = vpop.f32.mrf.mxu0
        %v1300 = vadd.f32 %v1171, %v1299
        %v1301 = vpop.f32.mrf.mxu0
        %1302 = vmatprep.mubr.f32.mxu0 0.0
        %1303 = vmatmul.mubr.f32.gmra.mxu0 %v1207
        %v1304 = vpop.f32.mrf.mxu0
        %v1305 = vadd.f32 %v1176, %v1304
        %v1306 = vpop.f32.mrf.mxu0
        %1307 = vmatprep.mubr.f32.mxu0 0.0
        %1308 = vmatmul.mubr.f32.gmra.mxu0 %v1210
        %v1309 = vpop.f32.mrf.mxu0
        %v1310 = vadd.f32 %v1181, %v1309
        %v1311 = vpop.f32.mrf.mxu0
        %1312 = vmatprep.mubr.f32.mxu0 0.0
        %1313 = vmatmul.mubr.f32.gmra.mxu0 %v1213
        %v1314 = vpop.f32.mrf.mxu0
        %v1315 = vadd.f32 %v1186, %v1314
        %v1316 = vpop.f32.mrf.mxu0
        %1317 = vmatprep.mubr.f32.mxu0 0.0
        %1318 = vmatmul.mubr.f32.gmra.mxu0 %v1216
        %v1319 = vpop.f32.mrf.mxu0
        %v1320 = vadd.f32 %v1191, %v1319
        %v1321 = vpop.f32.mrf.mxu0
        %1322 = vdwg.mxu0
        %v1323 = vmax.f32 %v1285, 0.0
        %v1324 = vmax.f32 %v1290, 0.0
        %v1325 = vmax.f32 %v1295, 0.0
        %v1326 = vmax.f32 %v1300, 0.0
        %v1327 = vmax.f32 %v1305, 0.0
        %v1328 = vmax.f32 %v1310, 0.0
        %v1329 = vmax.f32 %v1315, 0.0
        %v1330 = vmax.f32 %v1320, 0.0
        %v1331 = vld [vmem:[%s7] sm:$0xff]
        %v1332 = vld [vmem:[%s7 + $0x8] sm:$0xff]
        %v1333 = vld [vmem:[%s7 + $0x10] sm:$0xff]
        %v1334 = vld [vmem:[%s7 + $0x18] sm:$0xff]
        %v1335 = vld [vmem:[%s7 + $0x20] sm:$0xff]
        %v1336 = vld [vmem:[%s7 + $0x28] sm:$0xff]
        %v1337 = vld [vmem:[%s7 + $0x30] sm:$0xff]
        %v1338 = vld [vmem:[%s7 + $0x38] sm:$0xff]
        %v1339 = vld [vmem:[%s7 + $0x40] sm:$0xff]
        %v1340 = vld [vmem:[%s7 + $0x48] sm:$0xff]
        %v1341 = vld [vmem:[%s7 + $0x50] sm:$0xff]
        %v1342 = vld [vmem:[%s7 + $0x58] sm:$0xff]
        %v1343 = vld [vmem:[%s7 + $0x60] sm:$0xff]
        %v1344 = vld [vmem:[%s7 + $0x68] sm:$0xff]
        %v1345 = vld [vmem:[%s7 + $0x70] sm:$0xff]
        %v1346 = vld [vmem:[%s7 + $0x78] sm:$0xff]
        %v1347 = vld [vmem:[%s7 + $0x80] sm:$0xff]
        %v1348 = vld [vmem:[%s7 + $0x88] sm:$0xff]
        %v1349 = vld [vmem:[%s7 + $0x90] sm:$0xff]
        %v1350 = vld [vmem:[%s7 + $0x98] sm:$0xff]
        %v1351 = vld [vmem:[%s8] sm:$0xff]
        %v1352 = vld [vmem:[%s8 + $0x8] sm:$0xff]
        %v1353 = vld [vmem:[%s8 + $0x10] sm:$0xff]
        %v1354 = vld [vmem:[%s8 + $0x18] sm:$0xff]
        %v1355 = vld [vmem:[%s8 + $0x20] sm:$0xff]
        %v1356 = vld [vmem:[%s8 + $0x28] sm:$0xff]
        %v1357 = vld [vmem:[%s8 + $0x30] sm:$0xff]
        %v1358 = vld [vmem:[%s8 + $0x38] sm:$0xff]
        %v1359 = vld [vmem:[%s8 + $0x40] sm:$0xff]
        %v1360 = vld [vmem:[%s8 + $0x48] sm:$0xff]
        %v1361 = vld [vmem:[%s8 + $0x50] sm:$0xff]
        %v1362 = vld [vmem:[%s8 + $0x58] sm:$0xff]
        %v1363 = vld [vmem:[%s8 + $0x60] sm:$0xff]
        %v1364 = vld [vmem:[%s8 + $0x68] sm:$0xff]
        %v1365 = vld [vmem:[%s8 + $0x70] sm:$0xff]
        %v1366 = vld [vmem:[%s8 + $0x78] sm:$0xff]
        %v1367 = vld [vmem:[%s8 + $0x80] sm:$0xff]
        %v1368 = vld [vmem:[%s8 + $0x88] sm:$0xff]
        %v1369 = vld [vmem:[%s8 + $0x90] sm:$0xff]
        %v1370 = vld [vmem:[%s8 + $0x98] sm:$0xff]
        %1372 = vset.pattern.permute.xlu0 0
        %1373 = vperm.xlu0 %1372, %v1351
        %v1374 = vpop.permute.xlu0 %1373
        %1377 = vset.pattern.permute.xlu0 0
        %1378 = vperm.xlu0 %1377, %v1352
        %v1379 = vpop.permute.xlu0 %1378
        %1382 = vset.pattern.permute.xlu0 0
        %1383 = vperm.xlu0 %1382, %v1353
        %v1384 = vpop.permute.xlu0 %1383
        %1387 = vset.pattern.permute.xlu0 0
        %1388 = vperm.xlu0 %1387, %v1354
        %v1389 = vpop.permute.xlu0 %1388
        %1392 = vset.pattern.permute.xlu0 0
        %1393 = vperm.xlu0 %1392, %v1355
        %v1394 = vpop.permute.xlu0 %1393
        %1397 = vset.pattern.permute.xlu0 0
        %1398 = vperm.xlu0 %1397, %v1356
        %v1399 = vpop.permute.xlu0 %1398
        %1402 = vset.pattern.permute.xlu0 0
        %1403 = vperm.xlu0 %1402, %v1357
        %v1404 = vpop.permute.xlu0 %1403
        %1407 = vset.pattern.permute.xlu0 0
        %1408 = vperm.xlu0 %1407, %v1358
        %v1409 = vpop.permute.xlu0 %1408
        %1412 = vset.pattern.permute.xlu0 0
        %1413 = vperm.xlu0 %1412, %v1359
        %v1414 = vpop.permute.xlu0 %1413
        %1417 = vset.pattern.permute.xlu0 0
        %1418 = vperm.xlu0 %1417, %v1360
        %v1419 = vpop.permute.xlu0 %1418
        %1422 = vset.pattern.permute.xlu0 0
        %1423 = vperm.xlu0 %1422, %v1361
        %v1424 = vpop.permute.xlu0 %1423
        %1427 = vset.pattern.permute.xlu0 0
        %1428 = vperm.xlu0 %1427, %v1362
        %v1429 = vpop.permute.xlu0 %1428
        %1432 = vset.pattern.permute.xlu0 0
        %1433 = vperm.xlu0 %1432, %v1363
        %v1434 = vpop.permute.xlu0 %1433
        %1437 = vset.pattern.permute.xlu0 0
        %1438 = vperm.xlu0 %1437, %v1364
        %v1439 = vpop.permute.xlu0 %1438
        %1442 = vset.pattern.permute.xlu0 0
        %1443 = vperm.xlu0 %1442, %v1365
        %v1444 = vpop.permute.xlu0 %1443
        %1447 = vset.pattern.permute.xlu0 0
        %1448 = vperm.xlu0 %1447, %v1366
        %v1449 = vpop.permute.xlu0 %1448
        %1452 = vset.pattern.permute.xlu0 0
        %1453 = vperm.xlu0 %1452, %v1367
        %v1454 = vpop.permute.xlu0 %1453
        %1457 = vset.pattern.permute.xlu0 0
        %1458 = vperm.xlu0 %1457, %v1368
        %v1459 = vpop.permute.xlu0 %1458
        %1462 = vset.pattern.permute.xlu0 0
        %1463 = vperm.xlu0 %1462, %v1369
        %v1464 = vpop.permute.xlu0 %1463
        %1467 = vset.pattern.permute.xlu0 0
        %1468 = vperm.xlu0 %1467, %v1370
        %v1469 = vpop.permute.xlu0 %1468
        %v1472 = vsel %vm1193, %v1331, 0
        %v1475 = vsel %vm1193, %v1332, 0
        %v1478 = vsel %vm1193, %v1333, 0
        %v1481 = vsel %vm1193, %v1334, 0
        %v1484 = vsel %vm1193, %v1335, 0
        %v1487 = vsel %vm1193, %v1336, 0
        %v1490 = vsel %vm1193, %v1337, 0
        %v1493 = vsel %vm1193, %v1338, 0
        %v1496 = vsel %vm1193, %v1339, 0
        %v1499 = vsel %vm1193, %v1340, 0
        %v1502 = vsel %vm1193, %v1341, 0
        %v1505 = vsel %vm1193, %v1342, 0
        %v1508 = vsel %vm1193, %v1343, 0
        %v1511 = vsel %vm1193, %v1344, 0
        %v1514 = vsel %vm1193, %v1345, 0
        %v1517 = vsel %vm1193, %v1346, 0
        %v1520 = vsel %vm1193, %v1347, 0
        %v1523 = vsel %vm1193, %v1348, 0
        %v1526 = vsel %vm1193, %v1349, 0
        %v1529 = vsel %vm1193, %v1350, 0
        %1531 = vmatprep.subr.mxu0 0.0
        %1532 = vmatpush1.msra.mxu0 0.0
        %1533 = vmatprep.subr.mxu0 0.0
        %1534 = vmatpush1.msra.mxu0 0.0
        %1535 = vmatprep.subr.mxu0 0.0
        %1536 = vmatpush1.msra.mxu0 0.0
        %1537 = vmatprep.subr.mxu0 0.0
        %1538 = vmatpush1.msra.mxu0 0.0
        %1539 = vmatprep.subr.mxu0 0.0
        %1540 = vmatpush1.msra.mxu0 0.0
        %1541 = vmatprep.subr.mxu0 0.0
        %1542 = vmatpush1.msra.mxu0 0.0
        %1543 = vmatprep.subr.mxu0 0.0
        %1544 = vmatpush1.msra.mxu0 0.0
        %1545 = vmatprep.subr.mxu0 0.0
        %1546 = vmatpush1.msra.mxu0 0.0
        %1547 = vmatprep.subr.mxu0 0.0
        %1548 = vmatpush1.msra.mxu0 %v1330
        %1549 = vmatprep.subr.mxu0 0.0
        %1550 = vmatpush1.msra.mxu0 %v1329
        %1551 = vmatprep.subr.mxu0 0.0
        %1552 = vmatpush1.msra.mxu0 %v1328
        %1553 = vmatprep.subr.mxu0 0.0
        %1554 = vmatpush1.msra.mxu0 %v1327
        %1555 = vmatprep.subr.mxu0 0.0
        %1556 = vmatpush1.msra.mxu0 %v1326
        %1557 = vmatprep.subr.mxu0 0.0
        %1558 = vmatpush1.msra.mxu0 %v1325
        %1559 = vmatprep.subr.mxu0 0.0
        %1560 = vmatpush1.msra.mxu0 %v1324
        %1561 = vmatprep.subr.mxu0 0.0
        %1562 = vmatpush1.msra.mxu0 %v1323
        %1563 = vmatprep.subr.mxu0 0.0
        %1564 = vmatpush2.msra.mxu0 0.0
        %1565 = vmatprep.subr.mxu0 0.0
        %1566 = vmatpush2.msra.mxu0 0.0
        %1567 = vmatprep.subr.mxu0 0.0
        %1568 = vmatpush2.msra.mxu0 0.0
        %1569 = vmatprep.subr.mxu0 0.0
        %1570 = vmatpush2.msra.mxu0 0.0
        %1571 = vmatprep.subr.mxu0 0.0
        %1572 = vmatpush2.msra.mxu0 0.0
        %1573 = vmatprep.subr.mxu0 0.0
        %1574 = vmatpush2.msra.mxu0 0.0
        %1575 = vmatprep.subr.mxu0 0.0
        %1576 = vmatpush2.msra.mxu0 0.0
        %1577 = vmatprep.subr.mxu0 0.0
        %1578 = vmatpush2.msra.mxu0 0.0
        %1579 = vmatprep.subr.mxu0 0.0
        %1580 = vmatpush2.msra.mxu0 0.0
        %1581 = vmatprep.subr.mxu0 0.0
        %1582 = vmatpush2.msra.mxu0 0.0
        %1583 = vmatprep.subr.mxu0 0.0
        %1584 = vmatpush2.msra.mxu0 0.0
        %1585 = vmatprep.subr.mxu0 0.0
        %1586 = vmatpush2.msra.mxu0 0.0
        %1587 = vmatprep.subr.mxu0 0.0
        %1588 = vmatpush2.msra.mxu0 0.0
        %1589 = vmatprep.subr.mxu0 0.0
        %1590 = vmatpush2.msra.mxu0 0.0
        %1591 = vmatprep.subr.mxu0 0.0
        %1592 = vmatpush2.msra.mxu0 0.0
        %1593 = vmatprep.subr.mxu0 0.0
        %1594 = vmatpush2.msra.mxu0 0.0
        %1595 = vmatprep.mubr.f32.mxu0 0.0
        %1596 = vmatmul.mubr.f32.gmra.mxu0 %v1472
        %v1597 = vpop.f32.mrf.mxu0
        %v1598 = vadd.f32 %v1374, %v1597
        %v1599 = vpop.f32.mrf.mxu0
        %1600 = vmatprep.mubr.f32.mxu0 0.0
        %1601 = vmatmul.mubr.f32.gmra.mxu0 %v1475
        %v1602 = vpop.f32.mrf.mxu0
        %v1603 = vadd.f32 %v1379, %v1602
        %v1604 = vpop.f32.mrf.mxu0
        %1605 = vmatprep.mubr.f32.mxu0 0.0
        %1606 = vmatmul.mubr.f32.gmra.mxu0 %v1478
        %v1607 = vpop.f32.mrf.mxu0
        %v1608 = vadd.f32 %v1384, %v1607
        %v1609 = vpop.f32.mrf.mxu0
        %1610 = vmatprep.mubr.f32.mxu0 0.0
        %1611 = vmatmul.mubr.f32.gmra.mxu0 %v1481
        %v1612 = vpop.f32.mrf.mxu0
        %v1613 = vadd.f32 %v1389, %v1612
        %v1614 = vpop.f32.mrf.mxu0
        %1615 = vmatprep.mubr.f32.mxu0 0.0
        %1616 = vmatmul.mubr.f32.gmra.mxu0 %v1484
        %v1617 = vpop.f32.mrf.mxu0
        %v1618 = vadd.f32 %v1394, %v1617
        %v1619 = vpop.f32.mrf.mxu0
        %1620 = vmatprep.mubr.f32.mxu0 0.0
        %1621 = vmatmul.mubr.f32.gmra.mxu0 %v1487
        %v1622 = vpop.f32.mrf.mxu0
        %v1623 = vadd.f32 %v1399, %v1622
        %v1624 = vpop.f32.mrf.mxu0
        %1625 = vmatprep.mubr.f32.mxu0 0.0
        %1626 = vmatmul.mubr.f32.gmra.mxu0 %v1490
        %v1627 = vpop.f32.mrf.mxu0
        %v1628 = vadd.f32 %v1404, %v1627
        %v1629 = vpop.f32.mrf.mxu0
        %1630 = vmatprep.mubr.f32.mxu0 0.0
        %1631 = vmatmul.mubr.f32.gmra.mxu0 %v1493
        %v1632 = vpop.f32.mrf.mxu0
        %v1633 = vadd.f32 %v1409, %v1632
        %v1634 = vpop.f32.mrf.mxu0
        %1635 = vmatprep.mubr.f32.mxu0 0.0
        %1636 = vmatmul.mubr.f32.gmra.mxu0 %v1496
        %v1637 = vpop.f32.mrf.mxu0
        %v1638 = vadd.f32 %v1414, %v1637
        %v1639 = vpop.f32.mrf.mxu0
        %1640 = vmatprep.mubr.f32.mxu0 0.0
        %1641 = vmatmul.mubr.f32.gmra.mxu0 %v1499
        %v1642 = vpop.f32.mrf.mxu0
        %v1643 = vadd.f32 %v1419, %v1642
        %v1644 = vpop.f32.mrf.mxu0
        %1645 = vmatprep.mubr.f32.mxu0 0.0
        %1646 = vmatmul.mubr.f32.gmra.mxu0 %v1502
        %v1647 = vpop.f32.mrf.mxu0
        %v1648 = vadd.f32 %v1424, %v1647
        %v1649 = vpop.f32.mrf.mxu0
        %1650 = vmatprep.mubr.f32.mxu0 0.0
        %1651 = vmatmul.mubr.f32.gmra.mxu0 %v1505
        %v1652 = vpop.f32.mrf.mxu0
        %v1653 = vadd.f32 %v1429, %v1652
        %v1654 = vpop.f32.mrf.mxu0
        %1655 = vmatprep.mubr.f32.mxu0 0.0
        %1656 = vmatmul.mubr.f32.gmra.mxu0 %v1508
        %v1657 = vpop.f32.mrf.mxu0
        %v1658 = vadd.f32 %v1434, %v1657
        %v1659 = vpop.f32.mrf.mxu0
        %1660 = vmatprep.mubr.f32.mxu0 0.0
        %1661 = vmatmul.mubr.f32.gmra.mxu0 %v1511
        %v1662 = vpop.f32.mrf.mxu0
        %v1663 = vadd.f32 %v1439, %v1662
        %v1664 = vpop.f32.mrf.mxu0
        %1665 = vmatprep.mubr.f32.mxu0 0.0
        %1666 = vmatmul.mubr.f32.gmra.mxu0 %v1514
        %v1667 = vpop.f32.mrf.mxu0
        %v1668 = vadd.f32 %v1444, %v1667
        %v1669 = vpop.f32.mrf.mxu0
        %1670 = vmatprep.mubr.f32.mxu0 0.0
        %1671 = vmatmul.mubr.f32.gmra.mxu0 %v1517
        %v1672 = vpop.f32.mrf.mxu0
        %v1673 = vadd.f32 %v1449, %v1672
        %v1674 = vpop.f32.mrf.mxu0
        %1675 = vmatprep.mubr.f32.mxu0 0.0
        %1676 = vmatmul.mubr.f32.gmra.mxu0 %v1520
        %v1677 = vpop.f32.mrf.mxu0
        %v1678 = vadd.f32 %v1454, %v1677
        %v1679 = vpop.f32.mrf.mxu0
        %1680 = vmatprep.mubr.f32.mxu0 0.0
        %1681 = vmatmul.mubr.f32.gmra.mxu0 %v1523
        %v1682 = vpop.f32.mrf.mxu0
        %v1683 = vadd.f32 %v1459, %v1682
        %v1684 = vpop.f32.mrf.mxu0
        %1685 = vmatprep.mubr.f32.mxu0 0.0
        %1686 = vmatmul.mubr.f32.gmra.mxu0 %v1526
        %v1687 = vpop.f32.mrf.mxu0
        %v1688 = vadd.f32 %v1464, %v1687
        %v1689 = vpop.f32.mrf.mxu0
        %1690 = vmatprep.mubr.f32.mxu0 0.0
        %1691 = vmatmul.mubr.f32.gmra.mxu0 %v1529
        %v1692 = vpop.f32.mrf.mxu0
        %v1693 = vadd.f32 %v1469, %v1692
        %v1694 = vpop.f32.mrf.mxu0
        %1695 = vdwg.mxu0
        %v1696 = vmax.f32 %v1598, 0.0
        %v1697 = vmax.f32 %v1603, 0.0
        %v1698 = vmax.f32 %v1608, 0.0
        %v1699 = vmax.f32 %v1613, 0.0
        %v1700 = vmax.f32 %v1618, 0.0
        %v1701 = vmax.f32 %v1623, 0.0
        %v1702 = vmax.f32 %v1628, 0.0
        %v1703 = vmax.f32 %v1633, 0.0
        %v1704 = vmax.f32 %v1638, 0.0
        %v1705 = vmax.f32 %v1643, 0.0
        %v1706 = vmax.f32 %v1648, 0.0
        %v1707 = vmax.f32 %v1653, 0.0
        %v1708 = vmax.f32 %v1658, 0.0
        %v1709 = vmax.f32 %v1663, 0.0
        %v1710 = vmax.f32 %v1668, 0.0
        %v1711 = vmax.f32 %v1673, 0.0
        %v1712 = vmax.f32 %v1678, 0.0
        %v1713 = vmax.f32 %v1683, 0.0
        %v1714 = vmax.f32 %v1688, 0.0
        %v1715 = vmax.f32 %v1693, 0.0
        %v1716 = vld [vmem:[%s9] sm:$0xff]
        %v1717 = vld [vmem:[%s9 + $0x8] sm:$0xff]
        %v1718 = vld [vmem:[%s9 + $0x10] sm:$0xff]
        %v1719 = vld [vmem:[%s9 + $0x18] sm:$0xff]
        %v1720 = vld [vmem:[%s9 + $0x20] sm:$0xff]
        %v1721 = vld [vmem:[%s9 + $0x28] sm:$0xff]
        %v1722 = vld [vmem:[%s9 + $0x30] sm:$0xff]
        %v1723 = vld [vmem:[%s9 + $0x38] sm:$0xff]
        %v1724 = vld [vmem:[%s9 + $0x40] sm:$0xff]
        %v1725 = vld [vmem:[%s9 + $0x48] sm:$0xff]
        %v1726 = vld [vmem:[%s9 + $0x50] sm:$0xff]
        %v1727 = vld [vmem:[%s9 + $0x58] sm:$0xff]
        %v1728 = vld [vmem:[%s9 + $0x60] sm:$0xff]
        %v1729 = vld [vmem:[%s9 + $0x68] sm:$0xff]
        %v1730 = vld [vmem:[%s9 + $0x70] sm:$0xff]
        %v1731 = vld [vmem:[%s9 + $0x78] sm:$0xff]
        %v1732 = vld [vmem:[%s9 + $0x80] sm:$0xff]
        %v1733 = vld [vmem:[%s9 + $0x88] sm:$0xff]
        %v1734 = vld [vmem:[%s9 + $0x90] sm:$0xff]
        %v1735 = vld [vmem:[%s9 + $0x98] sm:$0xff]
        %v1736 = vld [vmem:[%s9 + $0xa0] sm:$0xff]
        %v1737 = vld [vmem:[%s9 + $0xa8] sm:$0xff]
        %v1738 = vld [vmem:[%s9 + $0xb0] sm:$0xff]
        %v1739 = vld [vmem:[%s9 + $0xb8] sm:$0xff]
        %v1740 = vld [vmem:[%s9 + $0xc0] sm:$0xff]
        %v1741 = vld [vmem:[%s9 + $0xc8] sm:$0xff]
        %v1742 = vld [vmem:[%s9 + $0xd0] sm:$0xff]
        %v1743 = vld [vmem:[%s9 + $0xd8] sm:$0xff]
        %v1744 = vld [vmem:[%s9 + $0xe0] sm:$0xff]
        %v1745 = vld [vmem:[%s9 + $0xe8] sm:$0xff]
        %v1746 = vld [vmem:[%s9 + $0xf0] sm:$0xff]
        %v1747 = vld [vmem:[%s9 + $0xf8] sm:$0xff]
        %v1748 = vld [vmem:[%s9 + $0x100] sm:$0xff]
        %v1749 = vld [vmem:[%s9 + $0x108] sm:$0xff]
        %v1750 = vld [vmem:[%s9 + $0x110] sm:$0xff]
        %v1751 = vld [vmem:[%s9 + $0x118] sm:$0xff]
        %v1752 = vld [vmem:[%s9 + $0x120] sm:$0xff]
        %v1753 = vld [vmem:[%s9 + $0x128] sm:$0xff]
        %v1754 = vld [vmem:[%s9 + $0x130] sm:$0xff]
        %v1755 = vld [vmem:[%s9 + $0x138] sm:$0xff]
        %v1756 = vld [vmem:[%s9 + $0x140] sm:$0xff]
        %v1757 = vld [vmem:[%s9 + $0x148] sm:$0xff]
        %v1758 = vld [vmem:[%s9 + $0x150] sm:$0xff]
        %v1759 = vld [vmem:[%s9 + $0x158] sm:$0xff]
        %v1760 = vld [vmem:[%s9 + $0x160] sm:$0xff]
        %v1761 = vld [vmem:[%s9 + $0x168] sm:$0xff]
        %v1762 = vld [vmem:[%s9 + $0x170] sm:$0xff]
        %v1763 = vld [vmem:[%s9 + $0x178] sm:$0xff]
        %v1764 = vld [vmem:[%s9 + $0x180] sm:$0xff]
        %v1765 = vld [vmem:[%s9 + $0x188] sm:$0xff]
        %v1766 = vld [vmem:[%s9 + $0x190] sm:$0xff]
        %v1767 = vld [vmem:[%s9 + $0x198] sm:$0xff]
        %v1768 = vld [vmem:[%s9 + $0x1a0] sm:$0xff]
        %v1769 = vld [vmem:[%s9 + $0x1a8] sm:$0xff]
        %v1770 = vld [vmem:[%s9 + $0x1b0] sm:$0xff]
        %v1771 = vld [vmem:[%s9 + $0x1b8] sm:$0xff]
        %v1772 = vld [vmem:[%s9 + $0x1c0] sm:$0xff]
        %v1773 = vld [vmem:[%s9 + $0x1c8] sm:$0xff]
        %v1774 = vld [vmem:[%s9 + $0x1d0] sm:$0xff]
        %v1775 = vld [vmem:[%s9 + $0x1d8] sm:$0xff]
        %v1776 = vld [vmem:[%s9 + $0x1e0] sm:$0xff]
        %v1777 = vld [vmem:[%s9 + $0x1e8] sm:$0xff]
        %v1778 = vld [vmem:[%s9 + $0x1f0] sm:$0xff]
        %v1779 = vld [vmem:[%s9 + $0x1f8] sm:$0xff]
        %v1780 = vld [vmem:[%s10] sm:$0xff]
        %v1781 = vld [vmem:[%s10 + $0x8] sm:$0xff]
        %v1782 = vld [vmem:[%s10 + $0x10] sm:$0xff]
        %v1783 = vld [vmem:[%s10 + $0x18] sm:$0xff]
        %v1784 = vld [vmem:[%s10 + $0x20] sm:$0xff]
        %v1785 = vld [vmem:[%s10 + $0x28] sm:$0xff]
        %v1786 = vld [vmem:[%s10 + $0x30] sm:$0xff]
        %v1787 = vld [vmem:[%s10 + $0x38] sm:$0xff]
        %v1788 = vld [vmem:[%s10 + $0x40] sm:$0xff]
        %v1789 = vld [vmem:[%s10 + $0x48] sm:$0xff]
        %v1790 = vld [vmem:[%s10 + $0x50] sm:$0xff]
        %v1791 = vld [vmem:[%s10 + $0x58] sm:$0xff]
        %v1792 = vld [vmem:[%s10 + $0x60] sm:$0xff]
        %v1793 = vld [vmem:[%s10 + $0x68] sm:$0xff]
        %v1794 = vld [vmem:[%s10 + $0x70] sm:$0xff]
        %v1795 = vld [vmem:[%s10 + $0x78] sm:$0xff]
        %v1796 = vld [vmem:[%s10 + $0x80] sm:$0xff]
        %v1797 = vld [vmem:[%s10 + $0x88] sm:$0xff]
        %v1798 = vld [vmem:[%s10 + $0x90] sm:$0xff]
        %v1799 = vld [vmem:[%s10 + $0x98] sm:$0xff]
        %v1800 = vld [vmem:[%s10 + $0xa0] sm:$0xff]
        %v1801 = vld [vmem:[%s10 + $0xa8] sm:$0xff]
        %v1802 = vld [vmem:[%s10 + $0xb0] sm:$0xff]
        %v1803 = vld [vmem:[%s10 + $0xb8] sm:$0xff]
        %v1804 = vld [vmem:[%s10 + $0xc0] sm:$0xff]
        %v1805 = vld [vmem:[%s10 + $0xc8] sm:$0xff]
        %v1806 = vld [vmem:[%s10 + $0xd0] sm:$0xff]
        %v1807 = vld [vmem:[%s10 + $0xd8] sm:$0xff]
        %v1808 = vld [vmem:[%s10 + $0xe0] sm:$0xff]
        %v1809 = vld [vmem:[%s10 + $0xe8] sm:$0xff]
        %v1810 = vld [vmem:[%s10 + $0xf0] sm:$0xff]
        %v1811 = vld [vmem:[%s10 + $0xf8] sm:$0xff]
        %1813 = vset.pattern.permute.xlu0 0
        %1814 = vperm.xlu0 %1813, %v1780
        %v1815 = vpop.permute.xlu0 %1814
        %1818 = vset.pattern.permute.xlu0 0
        %1819 = vperm.xlu0 %1818, %v1781
        %v1820 = vpop.permute.xlu0 %1819
        %1823 = vset.pattern.permute.xlu0 0
        %1824 = vperm.xlu0 %1823, %v1782
        %v1825 = vpop.permute.xlu0 %1824
        %1828 = vset.pattern.permute.xlu0 0
        %1829 = vperm.xlu0 %1828, %v1783
        %v1830 = vpop.permute.xlu0 %1829
        %1833 = vset.pattern.permute.xlu0 0
        %1834 = vperm.xlu0 %1833, %v1784
        %v1835 = vpop.permute.xlu0 %1834
        %1838 = vset.pattern.permute.xlu0 0
        %1839 = vperm.xlu0 %1838, %v1785
        %v1840 = vpop.permute.xlu0 %1839
        %1843 = vset.pattern.permute.xlu0 0
        %1844 = vperm.xlu0 %1843, %v1786
        %v1845 = vpop.permute.xlu0 %1844
        %1848 = vset.pattern.permute.xlu0 0
        %1849 = vperm.xlu0 %1848, %v1787
        %v1850 = vpop.permute.xlu0 %1849
        %1853 = vset.pattern.permute.xlu0 0
        %1854 = vperm.xlu0 %1853, %v1788
        %v1855 = vpop.permute.xlu0 %1854
        %1858 = vset.pattern.permute.xlu0 0
        %1859 = vperm.xlu0 %1858, %v1789
        %v1860 = vpop.permute.xlu0 %1859
        %1863 = vset.pattern.permute.xlu0 0
        %1864 = vperm.xlu0 %1863, %v1790
        %v1865 = vpop.permute.xlu0 %1864
        %1868 = vset.pattern.permute.xlu0 0
        %1869 = vperm.xlu0 %1868, %v1791
        %v1870 = vpop.permute.xlu0 %1869
        %1873 = vset.pattern.permute.xlu0 0
        %1874 = vperm.xlu0 %1873, %v1792
        %v1875 = vpop.permute.xlu0 %1874
        %1878 = vset.pattern.permute.xlu0 0
        %1879 = vperm.xlu0 %1878, %v1793
        %v1880 = vpop.permute.xlu0 %1879
        %1883 = vset.pattern.permute.xlu0 0
        %1884 = vperm.xlu0 %1883, %v1794
        %v1885 = vpop.permute.xlu0 %1884
        %1888 = vset.pattern.permute.xlu0 0
        %1889 = vperm.xlu0 %1888, %v1795
        %v1890 = vpop.permute.xlu0 %1889
        %1893 = vset.pattern.permute.xlu0 0
        %1894 = vperm.xlu0 %1893, %v1796
        %v1895 = vpop.permute.xlu0 %1894
        %1898 = vset.pattern.permute.xlu0 0
        %1899 = vperm.xlu0 %1898, %v1797
        %v1900 = vpop.permute.xlu0 %1899
        %1903 = vset.pattern.permute.xlu0 0
        %1904 = vperm.xlu0 %1903, %v1798
        %v1905 = vpop.permute.xlu0 %1904
        %1908 = vset.pattern.permute.xlu0 0
        %1909 = vperm.xlu0 %1908, %v1799
        %v1910 = vpop.permute.xlu0 %1909
        %1913 = vset.pattern.permute.xlu0 0
        %1914 = vperm.xlu0 %1913, %v1800
        %v1915 = vpop.permute.xlu0 %1914
        %1918 = vset.pattern.permute.xlu0 0
        %1919 = vperm.xlu0 %1918, %v1801
        %v1920 = vpop.permute.xlu0 %1919
        %1923 = vset.pattern.permute.xlu0 0
        %1924 = vperm.xlu0 %1923, %v1802
        %v1925 = vpop.permute.xlu0 %1924
        %1928 = vset.pattern.permute.xlu0 0
        %1929 = vperm.xlu0 %1928, %v1803
        %v1930 = vpop.permute.xlu0 %1929
        %1933 = vset.pattern.permute.xlu0 0
        %1934 = vperm.xlu0 %1933, %v1804
        %v1935 = vpop.permute.xlu0 %1934
        %1938 = vset.pattern.permute.xlu0 0
        %1939 = vperm.xlu0 %1938, %v1805
        %v1940 = vpop.permute.xlu0 %1939
        %1943 = vset.pattern.permute.xlu0 0
        %1944 = vperm.xlu0 %1943, %v1806
        %v1945 = vpop.permute.xlu0 %1944
        %1948 = vset.pattern.permute.xlu0 0
        %1949 = vperm.xlu0 %1948, %v1807
        %v1950 = vpop.permute.xlu0 %1949
        %1953 = vset.pattern.permute.xlu0 0
        %1954 = vperm.xlu0 %1953, %v1808
        %v1955 = vpop.permute.xlu0 %1954
        %1958 = vset.pattern.permute.xlu0 0
        %1959 = vperm.xlu0 %1958, %v1809
        %v1960 = vpop.permute.xlu0 %1959
        %1963 = vset.pattern.permute.xlu0 0
        %1964 = vperm.xlu0 %1963, %v1810
        %v1965 = vpop.permute.xlu0 %1964
        %1968 = vset.pattern.permute.xlu0 0
        %1969 = vperm.xlu0 %1968, %v1811
        %v1970 = vpop.permute.xlu0 %1969
        %v1973 = vsel %vm999, %v1717, 0
        %v1976 = vsel %vm999, %v1719, 0
        %v1979 = vsel %vm999, %v1721, 0
        %v1982 = vsel %vm999, %v1723, 0
        %v1985 = vsel %vm999, %v1725, 0
        %v1988 = vsel %vm999, %v1727, 0
        %v1991 = vsel %vm999, %v1729, 0
        %v1994 = vsel %vm999, %v1731, 0
        %v1997 = vsel %vm999, %v1733, 0
        %v2000 = vsel %vm999, %v1735, 0
        %v2003 = vsel %vm999, %v1737, 0
        %v2006 = vsel %vm999, %v1739, 0
        %v2009 = vsel %vm999, %v1741, 0
        %v2012 = vsel %vm999, %v1743, 0
        %v2015 = vsel %vm999, %v1745, 0
        %v2018 = vsel %vm999, %v1747, 0
        %v2021 = vsel %vm999, %v1749, 0
        %v2024 = vsel %vm999, %v1751, 0
        %v2027 = vsel %vm999, %v1753, 0
        %v2030 = vsel %vm999, %v1755, 0
        %v2033 = vsel %vm999, %v1757, 0
        %v2036 = vsel %vm999, %v1759, 0
        %v2039 = vsel %vm999, %v1761, 0
        %v2042 = vsel %vm999, %v1763, 0
        %v2045 = vsel %vm999, %v1765, 0
        %v2048 = vsel %vm999, %v1767, 0
        %v2051 = vsel %vm999, %v1769, 0
        %v2054 = vsel %vm999, %v1771, 0
        %v2057 = vsel %vm999, %v1773, 0
        %v2060 = vsel %vm999, %v1775, 0
        %v2063 = vsel %vm999, %v1777, 0
        %v2066 = vsel %vm999, %v1779, 0
        %2068 = vmatprep.subr.mxu0 0.0
        %2069 = vmatpush1.msra.mxu0 %v1711
        %2070 = vmatprep.subr.mxu0 0.0
        %2071 = vmatpush1.msra.mxu0 %v1710
        %2072 = vmatprep.subr.mxu0 0.0
        %2073 = vmatpush1.msra.mxu0 %v1709
        %2074 = vmatprep.subr.mxu0 0.0
        %2075 = vmatpush1.msra.mxu0 %v1708
        %2076 = vmatprep.subr.mxu0 0.0
        %2077 = vmatpush1.msra.mxu0 %v1707
        %2078 = vmatprep.subr.mxu0 0.0
        %2079 = vmatpush1.msra.mxu0 %v1706
        %2080 = vmatprep.subr.mxu0 0.0
        %2081 = vmatpush1.msra.mxu0 %v1705
        %2082 = vmatprep.subr.mxu0 0.0
        %2083 = vmatpush1.msra.mxu0 %v1704
        %2084 = vmatprep.subr.mxu0 0.0
        %2085 = vmatpush1.msra.mxu0 %v1703
        %2086 = vmatprep.subr.mxu0 0.0
        %2087 = vmatpush1.msra.mxu0 %v1702
        %2088 = vmatprep.subr.mxu0 0.0
        %2089 = vmatpush1.msra.mxu0 %v1701
        %2090 = vmatprep.subr.mxu0 0.0
        %2091 = vmatpush1.msra.mxu0 %v1700
        %2092 = vmatprep.subr.mxu0 0.0
        %2093 = vmatpush1.msra.mxu0 %v1699
        %2094 = vmatprep.subr.mxu0 0.0
        %2095 = vmatpush1.msra.mxu0 %v1698
        %2096 = vmatprep.subr.mxu0 0.0
        %2097 = vmatpush1.msra.mxu0 %v1697
        %2098 = vmatprep.subr.mxu0 0.0
        %2099 = vmatpush1.msra.mxu0 %v1696
        %2100 = vmatprep.subr.mxu0 0.0
        %2101 = vmatpush2.msra.mxu0 0.0
        %2102 = vmatprep.subr.mxu0 0.0
        %2103 = vmatpush2.msra.mxu0 0.0
        %2104 = vmatprep.subr.mxu0 0.0
        %2105 = vmatpush2.msra.mxu0 0.0
        %2106 = vmatprep.subr.mxu0 0.0
        %2107 = vmatpush2.msra.mxu0 0.0
        %2108 = vmatprep.subr.mxu0 0.0
        %2109 = vmatpush2.msra.mxu0 0.0
        %2110 = vmatprep.subr.mxu0 0.0
        %2111 = vmatpush2.msra.mxu0 0.0
        %2112 = vmatprep.subr.mxu0 0.0
        %2113 = vmatpush2.msra.mxu0 0.0
        %2114 = vmatprep.subr.mxu0 0.0
        %2115 = vmatpush2.msra.mxu0 0.0
        %2116 = vmatprep.subr.mxu0 0.0
        %2117 = vmatpush2.msra.mxu0 0.0
        %2118 = vmatprep.subr.mxu0 0.0
        %2119 = vmatpush2.msra.mxu0 0.0
        %2120 = vmatprep.subr.mxu0 0.0
        %2121 = vmatpush2.msra.mxu0 0.0
        %2122 = vmatprep.subr.mxu0 0.0
        %2123 = vmatpush2.msra.mxu0 0.0
        %2124 = vmatprep.subr.mxu0 0.0
        %2125 = vmatpush2.msra.mxu0 %v1715
        %2126 = vmatprep.subr.mxu0 0.0
        %2127 = vmatpush2.msra.mxu0 %v1714
        %2128 = vmatprep.subr.mxu0 0.0
        %2129 = vmatpush2.msra.mxu0 %v1713
        %2130 = vmatprep.subr.mxu0 0.0
        %2131 = vmatpush2.msra.mxu0 %v1712
        %2132 = vmatprep.mubr.f32.mxu0 %v1973
        %2133 = vmatmul.mubr.f32.gmra.mxu0 %v1716
        %v2134 = vpop.f32.mrf.mxu0
        %v2135 = vadd.f32 %v1815, %v2134
        %v2136 = vpop.f32.mrf.mxu0
        %2137 = vmatprep.mubr.f32.mxu0 %v1976
        %2138 = vmatmul.mubr.f32.gmra.mxu0 %v1718
        %v2139 = vpop.f32.mrf.mxu0
        %v2140 = vadd.f32 %v1820, %v2139
        %v2141 = vpop.f32.mrf.mxu0
        %2142 = vmatprep.mubr.f32.mxu0 %v1979
        %2143 = vmatmul.mubr.f32.gmra.mxu0 %v1720
        %v2144 = vpop.f32.mrf.mxu0
        %v2145 = vadd.f32 %v1825, %v2144
        %v2146 = vpop.f32.mrf.mxu0
        %2147 = vmatprep.mubr.f32.mxu0 %v1982
        %2148 = vmatmul.mubr.f32.gmra.mxu0 %v1722
        %v2149 = vpop.f32.mrf.mxu0
        %v2150 = vadd.f32 %v1830, %v2149
        %v2151 = vpop.f32.mrf.mxu0
        %2152 = vmatprep.mubr.f32.mxu0 %v1985
        %2153 = vmatmul.mubr.f32.gmra.mxu0 %v1724
        %v2154 = vpop.f32.mrf.mxu0
        %v2155 = vadd.f32 %v1835, %v2154
        %v2156 = vpop.f32.mrf.mxu0
        %2157 = vmatprep.mubr.f32.mxu0 %v1988
        %2158 = vmatmul.mubr.f32.gmra.mxu0 %v1726
        %v2159 = vpop.f32.mrf.mxu0
        %v2160 = vadd.f32 %v1840, %v2159
        %v2161 = vpop.f32.mrf.mxu0
        %2162 = vmatprep.mubr.f32.mxu0 %v1991
        %2163 = vmatmul.mubr.f32.gmra.mxu0 %v1728
        %v2164 = vpop.f32.mrf.mxu0
        %v2165 = vadd.f32 %v1845, %v2164
        %v2166 = vpop.f32.mrf.mxu0
        %2167 = vmatprep.mubr.f32.mxu0 %v1994
        %2168 = vmatmul.mubr.f32.gmra.mxu0 %v1730
        %v2169 = vpop.f32.mrf.mxu0
        %v2170 = vadd.f32 %v1850, %v2169
        %v2171 = vpop.f32.mrf.mxu0
        %2172 = vmatprep.mubr.f32.mxu0 %v1997
        %2173 = vmatmul.mubr.f32.gmra.mxu0 %v1732
        %v2174 = vpop.f32.mrf.mxu0
        %v2175 = vadd.f32 %v1855, %v2174
        %v2176 = vpop.f32.mrf.mxu0
        %2177 = vmatprep.mubr.f32.mxu0 %v2000
        %2178 = vmatmul.mubr.f32.gmra.mxu0 %v1734
        %v2179 = vpop.f32.mrf.mxu0
        %v2180 = vadd.f32 %v1860, %v2179
        %v2181 = vpop.f32.mrf.mxu0
        %2182 = vmatprep.mubr.f32.mxu0 %v2003
        %2183 = vmatmul.mubr.f32.gmra.mxu0 %v1736
        %v2184 = vpop.f32.mrf.mxu0
        %v2185 = vadd.f32 %v1865, %v2184
        %v2186 = vpop.f32.mrf.mxu0
        %2187 = vmatprep.mubr.f32.mxu0 %v2006
        %2188 = vmatmul.mubr.f32.gmra.mxu0 %v1738
        %v2189 = vpop.f32.mrf.mxu0
        %v2190 = vadd.f32 %v1870, %v2189
        %v2191 = vpop.f32.mrf.mxu0
        %2192 = vmatprep.mubr.f32.mxu0 %v2009
        %2193 = vmatmul.mubr.f32.gmra.mxu0 %v1740
        %v2194 = vpop.f32.mrf.mxu0
        %v2195 = vadd.f32 %v1875, %v2194
        %v2196 = vpop.f32.mrf.mxu0
        %2197 = vmatprep.mubr.f32.mxu0 %v2012
        %2198 = vmatmul.mubr.f32.gmra.mxu0 %v1742
        %v2199 = vpop.f32.mrf.mxu0
        %v2200 = vadd.f32 %v1880, %v2199
        %v2201 = vpop.f32.mrf.mxu0
        %2202 = vmatprep.mubr.f32.mxu0 %v2015
        %2203 = vmatmul.mubr.f32.gmra.mxu0 %v1744
        %v2204 = vpop.f32.mrf.mxu0
        %v2205 = vadd.f32 %v1885, %v2204
        %v2206 = vpop.f32.mrf.mxu0
        %2207 = vmatprep.mubr.f32.mxu0 %v2018
        %2208 = vmatmul.mubr.f32.gmra.mxu0 %v1746
        %v2209 = vpop.f32.mrf.mxu0
        %v2210 = vadd.f32 %v1890, %v2209
        %v2211 = vpop.f32.mrf.mxu0
        %2212 = vmatprep.mubr.f32.mxu0 %v2021
        %2213 = vmatmul.mubr.f32.gmra.mxu0 %v1748
        %v2214 = vpop.f32.mrf.mxu0
        %v2215 = vadd.f32 %v1895, %v2214
        %v2216 = vpop.f32.mrf.mxu0
        %2217 = vmatprep.mubr.f32.mxu0 %v2024
        %2218 = vmatmul.mubr.f32.gmra.mxu0 %v1750
        %v2219 = vpop.f32.mrf.mxu0
        %v2220 = vadd.f32 %v1900, %v2219
        %v2221 = vpop.f32.mrf.mxu0
        %2222 = vmatprep.mubr.f32.mxu0 %v2027
        %2223 = vmatmul.mubr.f32.gmra.mxu0 %v1752
        %v2224 = vpop.f32.mrf.mxu0
        %v2225 = vadd.f32 %v1905, %v2224
        %v2226 = vpop.f32.mrf.mxu0
        %2227 = vmatprep.mubr.f32.mxu0 %v2030
        %2228 = vmatmul.mubr.f32.gmra.mxu0 %v1754
        %v2229 = vpop.f32.mrf.mxu0
        %v2230 = vadd.f32 %v1910, %v2229
        %v2231 = vpop.f32.mrf.mxu0
        %2232 = vmatprep.mubr.f32.mxu0 %v2033
        %2233 = vmatmul.mubr.f32.gmra.mxu0 %v1756
        %v2234 = vpop.f32.mrf.mxu0
        %v2235 = vadd.f32 %v1915, %v2234
        %v2236 = vpop.f32.mrf.mxu0
        %2237 = vmatprep.mubr.f32.mxu0 %v2036
        %2238 = vmatmul.mubr.f32.gmra.mxu0 %v1758
        %v2239 = vpop.f32.mrf.mxu0
        %v2240 = vadd.f32 %v1920, %v2239
        %v2241 = vpop.f32.mrf.mxu0
        %2242 = vmatprep.mubr.f32.mxu0 %v2039
        %2243 = vmatmul.mubr.f32.gmra.mxu0 %v1760
        %v2244 = vpop.f32.mrf.mxu0
        %v2245 = vadd.f32 %v1925, %v2244
        %v2246 = vpop.f32.mrf.mxu0
        %2247 = vmatprep.mubr.f32.mxu0 %v2042
        %2248 = vmatmul.mubr.f32.gmra.mxu0 %v1762
        %v2249 = vpop.f32.mrf.mxu0
        %v2250 = vadd.f32 %v1930, %v2249
        %v2251 = vpop.f32.mrf.mxu0
        %2252 = vmatprep.mubr.f32.mxu0 %v2045
        %2253 = vmatmul.mubr.f32.gmra.mxu0 %v1764
        %v2254 = vpop.f32.mrf.mxu0
        %v2255 = vadd.f32 %v1935, %v2254
        %v2256 = vpop.f32.mrf.mxu0
        %2257 = vmatprep.mubr.f32.mxu0 %v2048
        %2258 = vmatmul.mubr.f32.gmra.mxu0 %v1766
        %v2259 = vpop.f32.mrf.mxu0
        %v2260 = vadd.f32 %v1940, %v2259
        %v2261 = vpop.f32.mrf.mxu0
        %2262 = vmatprep.mubr.f32.mxu0 %v2051
        %2263 = vmatmul.mubr.f32.gmra.mxu0 %v1768
        %v2264 = vpop.f32.mrf.mxu0
        %v2265 = vadd.f32 %v1945, %v2264
        %v2266 = vpop.f32.mrf.mxu0
        %2267 = vmatprep.mubr.f32.mxu0 %v2054
        %2268 = vmatmul.mubr.f32.gmra.mxu0 %v1770
        %v2269 = vpop.f32.mrf.mxu0
        %v2270 = vadd.f32 %v1950, %v2269
        %v2271 = vpop.f32.mrf.mxu0
        %2272 = vmatprep.mubr.f32.mxu0 %v2057
        %2273 = vmatmul.mubr.f32.gmra.mxu0 %v1772
        %v2274 = vpop.f32.mrf.mxu0
        %v2275 = vadd.f32 %v1955, %v2274
        %v2276 = vpop.f32.mrf.mxu0
        %2277 = vmatprep.mubr.f32.mxu0 %v2060
        %2278 = vmatmul.mubr.f32.gmra.mxu0 %v1774
        %v2279 = vpop.f32.mrf.mxu0
        %v2280 = vadd.f32 %v1960, %v2279
        %v2281 = vpop.f32.mrf.mxu0
        %2282 = vmatprep.mubr.f32.mxu0 %v2063
        %2283 = vmatmul.mubr.f32.gmra.mxu0 %v1776
        %v2284 = vpop.f32.mrf.mxu0
        %v2285 = vadd.f32 %v1965, %v2284
        %v2286 = vpop.f32.mrf.mxu0
        %2287 = vmatprep.mubr.f32.mxu0 %v2066
        %2288 = vmatmul.mubr.f32.gmra.mxu0 %v1778
        %v2289 = vpop.f32.mrf.mxu0
        %v2290 = vadd.f32 %v1970, %v2289
        %v2291 = vpop.f32.mrf.mxu0
        %2292 = vdwg.mxu0
        %2293 = vst [vmem:[%s557] sm:$0xff] %v2135
        %2294 = vst [vmem:[%s557 + $0x8] sm:$0xff] %v2140
        %2295 = vst [vmem:[%s557 + $0x10] sm:$0xff] %v2145
        %2296 = vst [vmem:[%s557 + $0x18] sm:$0xff] %v2150
        %2297 = vst [vmem:[%s557 + $0x20] sm:$0xff] %v2155
        %2298 = vst [vmem:[%s557 + $0x28] sm:$0xff] %v2160
        %2299 = vst [vmem:[%s557 + $0x30] sm:$0xff] %v2165
        %2300 = vst [vmem:[%s557 + $0x38] sm:$0xff] %v2170
        %2301 = vst [vmem:[%s557 + $0x40] sm:$0xff] %v2175
        %2302 = vst [vmem:[%s557 + $0x48] sm:$0xff] %v2180
        %2303 = vst [vmem:[%s557 + $0x50] sm:$0xff] %v2185
        %2304 = vst [vmem:[%s557 + $0x58] sm:$0xff] %v2190
        %2305 = vst [vmem:[%s557 + $0x60] sm:$0xff] %v2195
        %2306 = vst [vmem:[%s557 + $0x68] sm:$0xff] %v2200
        %2307 = vst [vmem:[%s557 + $0x70] sm:$0xff] %v2205
        %2308 = vst [vmem:[%s557 + $0x78] sm:$0xff] %v2210
        %2309 = vst [vmem:[%s557 + $0x80] sm:$0xff] %v2215
        %2310 = vst [vmem:[%s557 + $0x88] sm:$0xff] %v2220
        %2311 = vst [vmem:[%s557 + $0x90] sm:$0xff] %v2225
        %2312 = vst [vmem:[%s557 + $0x98] sm:$0xff] %v2230
        %2313 = vst [vmem:[%s557 + $0xa0] sm:$0xff] %v2235
        %2314 = vst [vmem:[%s557 + $0xa8] sm:$0xff] %v2240
        %2315 = vst [vmem:[%s557 + $0xb0] sm:$0xff] %v2245
        %2316 = vst [vmem:[%s557 + $0xb8] sm:$0xff] %v2250
        %2317 = vst [vmem:[%s557 + $0xc0] sm:$0xff] %v2255
        %2318 = vst [vmem:[%s557 + $0xc8] sm:$0xff] %v2260
        %2319 = vst [vmem:[%s557 + $0xd0] sm:$0xff] %v2265
        %2320 = vst [vmem:[%s557 + $0xd8] sm:$0xff] %v2270
        %2321 = vst [vmem:[%s557 + $0xe0] sm:$0xff] %v2275
        %2322 = vst [vmem:[%s557 + $0xe8] sm:$0xff] %v2280
        %2323 = vst [vmem:[%s557 + $0xf0] sm:$0xff] %v2285
        %2324 = vst [vmem:[%s557 + $0xf8] sm:$0xff] %v2290
        %s2325 = sand.u32 %s282, 1
        %s2326 = sand.u32 %s282, 1
        %s2327 = smul.addr %s2326, 256
        %s2328 = scalar_lea.vmem [#allocation3], %s2327
        // Predicated region
        $region103: #{featcae_forward.1} parent=97 // pred_check
          %p2329 = pneg %p292
        $region104: #{featcae_forward.1} parent=97 // pred_check_branch
          %2331 = sbr.rel (%p2329) target = $region106
        $region105: #{featcae_forward.1} parent=97 // pred_region
          %s2332 = smul.addr %s26, 64
          %s2333 = sadd.s32 %s27, %s2332
          %s2334 = smul.addr %s2333, 8
          %s2335 = scalar_lea.vmem %s11, %s2334
          // Predicated region
          $region107: #{featcae_forward.1} parent=105 // pred_check
            _
          $region108: #{featcae_forward.1} parent=105 // pred_check_branch
            %2337 = sbr.rel (0) target = $region110
          $region109: #{featcae_forward.1} parent=105 // pred_region
            // Predicated region
            $region111: #{featcae_forward.1} parent=109 // pred_check
              _
            $region112: #{featcae_forward.1} parent=109 // pred_check_branch
              %2339 = sbr.rel (0) target = $region114
            $region113: #{featcae_forward.1} parent=109 // pred_region
              // Predicated region
              $region126: #{featcae_forward.1} parent=113 // pred_check
                _
              $region127: #{featcae_forward.1} parent=113 // pred_check_branch
                %2417 = sbr.rel (0) target = $region129
              $region128: #{featcae_forward.1} parent=113 // pred_region
                loop: start=0, step=1, limit=1
                $region130: #{featcae_forward.1} parent=128 // loop_pre_header
                  _
                $region131: #{featcae_forward.1} parent=128 // loop_header
                  %s2419 = sphi 0, %s2423
                  %p2420 = scmp.ge.s32.totalorder %s2419, 1
                  %s2424 = sphi %s2328, %s2328
                  %s2425 = sphi %s2335, %s2335
                $region132: #{featcae_forward.1} parent=128 // loop_header_branch
                  %2422 = sbr.rel (%p2420) target = $region136
                $region133: #{featcae_forward.1} parent=128 // loop_body
                  %v2426 = vld [vmem:[%s2424] sm:$0xff]
                  %2427 = vst [vmem:[%s2425] sm:$0xff] %v2426
                  %v2428 = vld [vmem:[%s2424 + $0x8] sm:$0xff]
                  %2429 = vst [vmem:[%s2425 + $0x10] sm:$0xff] %v2428
                  %v2430 = vld [vmem:[%s2424 + $0x10] sm:$0xff]
                  %2431 = vst [vmem:[%s2425 + $0x20] sm:$0xff] %v2430
                  %v2432 = vld [vmem:[%s2424 + $0x18] sm:$0xff]
                  %2433 = vst [vmem:[%s2425 + $0x30] sm:$0xff] %v2432
                  %v2434 = vld [vmem:[%s2424 + $0x20] sm:$0xff]
                  %2435 = vst [vmem:[%s2425 + $0x40] sm:$0xff] %v2434
                  %v2436 = vld [vmem:[%s2424 + $0x28] sm:$0xff]
                  %2437 = vst [vmem:[%s2425 + $0x50] sm:$0xff] %v2436
                  %v2438 = vld [vmem:[%s2424 + $0x30] sm:$0xff]
                  %2439 = vst [vmem:[%s2425 + $0x60] sm:$0xff] %v2438
                  %v2440 = vld [vmem:[%s2424 + $0x38] sm:$0xff]
                  %2441 = vst [vmem:[%s2425 + $0x70] sm:$0xff] %v2440
                  %v2442 = vld [vmem:[%s2424 + $0x40] sm:$0xff]
                  %2443 = vst [vmem:[%s2425 + $0x80] sm:$0xff] %v2442
                  %v2444 = vld [vmem:[%s2424 + $0x48] sm:$0xff]
                  %2445 = vst [vmem:[%s2425 + $0x90] sm:$0xff] %v2444
                  %v2446 = vld [vmem:[%s2424 + $0x50] sm:$0xff]
                  %2447 = vst [vmem:[%s2425 + $0xa0] sm:$0xff] %v2446
                  %v2448 = vld [vmem:[%s2424 + $0x58] sm:$0xff]
                  %2449 = vst [vmem:[%s2425 + $0xb0] sm:$0xff] %v2448
                  %v2450 = vld [vmem:[%s2424 + $0x60] sm:$0xff]
                  %2451 = vst [vmem:[%s2425 + $0xc0] sm:$0xff] %v2450
                  %v2452 = vld [vmem:[%s2424 + $0x68] sm:$0xff]
                  %2453 = vst [vmem:[%s2425 + $0xd0] sm:$0xff] %v2452
                  %v2454 = vld [vmem:[%s2424 + $0x70] sm:$0xff]
                  %2455 = vst [vmem:[%s2425 + $0xe0] sm:$0xff] %v2454
                  %v2456 = vld [vmem:[%s2424 + $0x78] sm:$0xff]
                  %2457 = vst [vmem:[%s2425 + $0xf0] sm:$0xff] %v2456
                  %v2458 = vld [vmem:[%s2424 + $0x80] sm:$0xff]
                  %2459 = vst [vmem:[%s2425 + $0x100] sm:$0xff] %v2458
                  %v2460 = vld [vmem:[%s2424 + $0x88] sm:$0xff]
                  %2461 = vst [vmem:[%s2425 + $0x110] sm:$0xff] %v2460
                  %v2462 = vld [vmem:[%s2424 + $0x90] sm:$0xff]
                  %2463 = vst [vmem:[%s2425 + $0x120] sm:$0xff] %v2462
                  %v2464 = vld [vmem:[%s2424 + $0x98] sm:$0xff]
                  %2465 = vst [vmem:[%s2425 + $0x130] sm:$0xff] %v2464
                  %v2466 = vld [vmem:[%s2424 + $0xa0] sm:$0xff]
                  %2467 = vst [vmem:[%s2425 + $0x140] sm:$0xff] %v2466
                  %v2468 = vld [vmem:[%s2424 + $0xa8] sm:$0xff]
                  %2469 = vst [vmem:[%s2425 + $0x150] sm:$0xff] %v2468
                  %v2470 = vld [vmem:[%s2424 + $0xb0] sm:$0xff]
                  %2471 = vst [vmem:[%s2425 + $0x160] sm:$0xff] %v2470
                  %v2472 = vld [vmem:[%s2424 + $0xb8] sm:$0xff]
                  %2473 = vst [vmem:[%s2425 + $0x170] sm:$0xff] %v2472
                  %v2474 = vld [vmem:[%s2424 + $0xc0] sm:$0xff]
                  %2475 = vst [vmem:[%s2425 + $0x180] sm:$0xff] %v2474
                  %v2476 = vld [vmem:[%s2424 + $0xc8] sm:$0xff]
                  %2477 = vst [vmem:[%s2425 + $0x190] sm:$0xff] %v2476
                  %v2478 = vld [vmem:[%s2424 + $0xd0] sm:$0xff]
                  %2479 = vst [vmem:[%s2425 + $0x1a0] sm:$0xff] %v2478
                  %v2480 = vld [vmem:[%s2424 + $0xd8] sm:$0xff]
                  %2481 = vst [vmem:[%s2425 + $0x1b0] sm:$0xff] %v2480
                  %v2482 = vld [vmem:[%s2424 + $0xe0] sm:$0xff]
                  %2483 = vst [vmem:[%s2425 + $0x1c0] sm:$0xff] %v2482
                  %v2484 = vld [vmem:[%s2424 + $0xe8] sm:$0xff]
                  %2485 = vst [vmem:[%s2425 + $0x1d0] sm:$0xff] %v2484
                  %v2486 = vld [vmem:[%s2424 + $0xf0] sm:$0xff]
                  %2487 = vst [vmem:[%s2425 + $0x1e0] sm:$0xff] %v2486
                  %v2488 = vld [vmem:[%s2424 + $0xf8] sm:$0xff]
                  %2489 = vst [vmem:[%s2425 + $0x1f0] sm:$0xff] %v2488
                $region134: #{featcae_forward.1} parent=128 // loop_footer
                  %s2423 = sadd.s32 1, %s2419
                $region135: #{featcae_forward.1} parent=128 // loop_footer_branch
                  %2418 = sbr.rel target = $region131
                $region136: #{featcae_forward.1} parent=128 // loop_exit
                  _
              $region129: #{featcae_forward.1} parent=113 // pred_fallthru
                _
              // Predicated region
              $region137: #{featcae_forward.1} parent=113 // pred_check
                _
              $region138: #{featcae_forward.1} parent=113 // pred_check_branch
                %2491 = sbr.rel target = $region140
              $region139: #{featcae_forward.1} parent=113 // pred_region
                _
              $region140: #{featcae_forward.1} parent=113 // pred_fallthru
                _
            $region114: #{featcae_forward.1} parent=109 // pred_fallthru
              _
            // Predicated region
            $region115: #{featcae_forward.1} parent=109 // pred_check
              _
            $region116: #{featcae_forward.1} parent=109 // pred_check_branch
              %2341 = sbr.rel target = $region118
            $region117: #{featcae_forward.1} parent=109 // pred_region
              %s2343 = ssub.s32 256, 1
              loop: start=0, step=1, limit=1
              $region119: #{featcae_forward.1} parent=117 // loop_pre_header
                _
              $region120: #{featcae_forward.1} parent=117 // loop_header
                %s2345 = sphi 0, %s2349
                %p2346 = scmp.ge.s32.totalorder %s2345, 1
                %s2350 = sphi %s2328, %s2328
                %s2351 = sphi %s2335, %s2335
              $region121: #{featcae_forward.1} parent=117 // loop_header_branch
                %2348 = sbr.rel (%p2346) target = $region125
              $region122: #{featcae_forward.1} parent=117 // loop_body
                %v2352 = vld [vmem:[%s2350] sm:%s2343]
                %2353 = vst [vmem:[%s2351] sm:%s2343] %v2352
                %v2354 = vld [vmem:[%s2350 + $0x8] sm:%s2343]
                %2355 = vst [vmem:[%s2351 + $0x10] sm:%s2343] %v2354
                %v2356 = vld [vmem:[%s2350 + $0x10] sm:%s2343]
                %2357 = vst [vmem:[%s2351 + $0x20] sm:%s2343] %v2356
                %v2358 = vld [vmem:[%s2350 + $0x18] sm:%s2343]
                %2359 = vst [vmem:[%s2351 + $0x30] sm:%s2343] %v2358
                %v2360 = vld [vmem:[%s2350 + $0x20] sm:%s2343]
                %2361 = vst [vmem:[%s2351 + $0x40] sm:%s2343] %v2360
                %v2362 = vld [vmem:[%s2350 + $0x28] sm:%s2343]
                %2363 = vst [vmem:[%s2351 + $0x50] sm:%s2343] %v2362
                %v2364 = vld [vmem:[%s2350 + $0x30] sm:%s2343]
                %2365 = vst [vmem:[%s2351 + $0x60] sm:%s2343] %v2364
                %v2366 = vld [vmem:[%s2350 + $0x38] sm:%s2343]
                %2367 = vst [vmem:[%s2351 + $0x70] sm:%s2343] %v2366
                %v2368 = vld [vmem:[%s2350 + $0x40] sm:%s2343]
                %2369 = vst [vmem:[%s2351 + $0x80] sm:%s2343] %v2368
                %v2370 = vld [vmem:[%s2350 + $0x48] sm:%s2343]
                %2371 = vst [vmem:[%s2351 + $0x90] sm:%s2343] %v2370
                %v2372 = vld [vmem:[%s2350 + $0x50] sm:%s2343]
                %2373 = vst [vmem:[%s2351 + $0xa0] sm:%s2343] %v2372
                %v2374 = vld [vmem:[%s2350 + $0x58] sm:%s2343]
                %2375 = vst [vmem:[%s2351 + $0xb0] sm:%s2343] %v2374
                %v2376 = vld [vmem:[%s2350 + $0x60] sm:%s2343]
                %2377 = vst [vmem:[%s2351 + $0xc0] sm:%s2343] %v2376
                %v2378 = vld [vmem:[%s2350 + $0x68] sm:%s2343]
                %2379 = vst [vmem:[%s2351 + $0xd0] sm:%s2343] %v2378
                %v2380 = vld [vmem:[%s2350 + $0x70] sm:%s2343]
                %2381 = vst [vmem:[%s2351 + $0xe0] sm:%s2343] %v2380
                %v2382 = vld [vmem:[%s2350 + $0x78] sm:%s2343]
                %2383 = vst [vmem:[%s2351 + $0xf0] sm:%s2343] %v2382
                %v2384 = vld [vmem:[%s2350 + $0x80] sm:%s2343]
                %2385 = vst [vmem:[%s2351 + $0x100] sm:%s2343] %v2384
                %v2386 = vld [vmem:[%s2350 + $0x88] sm:%s2343]
                %2387 = vst [vmem:[%s2351 + $0x110] sm:%s2343] %v2386
                %v2388 = vld [vmem:[%s2350 + $0x90] sm:%s2343]
                %2389 = vst [vmem:[%s2351 + $0x120] sm:%s2343] %v2388
                %v2390 = vld [vmem:[%s2350 + $0x98] sm:%s2343]
                %2391 = vst [vmem:[%s2351 + $0x130] sm:%s2343] %v2390
                %v2392 = vld [vmem:[%s2350 + $0xa0] sm:%s2343]
                %2393 = vst [vmem:[%s2351 + $0x140] sm:%s2343] %v2392
                %v2394 = vld [vmem:[%s2350 + $0xa8] sm:%s2343]
                %2395 = vst [vmem:[%s2351 + $0x150] sm:%s2343] %v2394
                %v2396 = vld [vmem:[%s2350 + $0xb0] sm:%s2343]
                %2397 = vst [vmem:[%s2351 + $0x160] sm:%s2343] %v2396
                %v2398 = vld [vmem:[%s2350 + $0xb8] sm:%s2343]
                %2399 = vst [vmem:[%s2351 + $0x170] sm:%s2343] %v2398
                %v2400 = vld [vmem:[%s2350 + $0xc0] sm:%s2343]
                %2401 = vst [vmem:[%s2351 + $0x180] sm:%s2343] %v2400
                %v2402 = vld [vmem:[%s2350 + $0xc8] sm:%s2343]
                %2403 = vst [vmem:[%s2351 + $0x190] sm:%s2343] %v2402
                %v2404 = vld [vmem:[%s2350 + $0xd0] sm:%s2343]
                %2405 = vst [vmem:[%s2351 + $0x1a0] sm:%s2343] %v2404
                %v2406 = vld [vmem:[%s2350 + $0xd8] sm:%s2343]
                %2407 = vst [vmem:[%s2351 + $0x1b0] sm:%s2343] %v2406
                %v2408 = vld [vmem:[%s2350 + $0xe0] sm:%s2343]
                %2409 = vst [vmem:[%s2351 + $0x1c0] sm:%s2343] %v2408
                %v2410 = vld [vmem:[%s2350 + $0xe8] sm:%s2343]
                %2411 = vst [vmem:[%s2351 + $0x1d0] sm:%s2343] %v2410
                %v2412 = vld [vmem:[%s2350 + $0xf0] sm:%s2343]
                %2413 = vst [vmem:[%s2351 + $0x1e0] sm:%s2343] %v2412
                %v2414 = vld [vmem:[%s2350 + $0xf8] sm:%s2343]
                %2415 = vst [vmem:[%s2351 + $0x1f0] sm:%s2343] %v2414
              $region123: #{featcae_forward.1} parent=117 // loop_footer
                %s2349 = sadd.s32 1, %s2345
              $region124: #{featcae_forward.1} parent=117 // loop_footer_branch
                %2344 = sbr.rel target = $region120
              $region125: #{featcae_forward.1} parent=117 // loop_exit
                _
            $region118: #{featcae_forward.1} parent=109 // pred_fallthru
              _
          $region110: #{featcae_forward.1} parent=105 // pred_fallthru
            _
          %2492 = vnop
        $region106: #{featcae_forward.1} parent=97 // pred_fallthru
          _
      $region98: #{featcae_forward.1} parent=5 // pred_fallthru
        _
      %p2493 = scmp.le.s32.totalorder 2, %s17
      // Predicated region
      $region141: #{featcae_forward.1} parent=5 // pred_check
        %p2494 = pneg %p2493
      $region142: #{featcae_forward.1} parent=5 // pred_check_branch
        %2496 = sbr.rel (%p2494) target = $region144
      $region143: #{featcae_forward.1} parent=5 // pred_region
        %s2497 = ssub.s32 %s17, 2
        // Predicated region
        $region145: #{featcae_forward.1} parent=143 // pred_check
          %p2498 = pneg %p298
        $region146: #{featcae_forward.1} parent=143 // pred_check_branch
          %2500 = sbr.rel (%p2498) target = $region148
        $region147: #{featcae_forward.1} parent=143 // pred_region
          %s2501 = sand.u32 %s283, 1
          %s2502 = sand.u32 %s283, 1
          %s2503 = smul.addr %s2502, 256
          %s2504 = scalar_lea.vmem [#allocation3], %s2503
        $region148: #{featcae_forward.1} parent=143 // pred_fallthru
          _
      $region144: #{featcae_forward.1} parent=5 // pred_fallthru
        _
    $region6: #{featcae_forward.1} parent=1 // loop_footer
      %s21 = sadd.s32 1, %s17
    $region7: #{featcae_forward.1} parent=1 // loop_footer_branch
      %16 = sbr.rel target = $region3
    $region8: #{featcae_forward.1} parent=1 // loop_exit
      _

</llo_original>
